<compile_context>
chip_gen: v7x
topology: tpu7x:2x2x1
jax: 0.10.0
libtpu: 0.0.40
codegen_flags: <defaults>
</compile_context>

<pallas_src>
import jax
import jax.numpy as jnp
from jax.experimental import pallas as pl
from jax.experimental.pallas import tpu as pltpu


# VMEM budgets chosen to fit every generation (v7x has 64 MiB per TensorCore,
# v5e/v6e have 128 MiB).
_VMEM_BUDGET = 40 * 1024 * 1024      # budget used for tile selection
_WEIGHT_BUDGET = 16 * 1024 * 1024    # max double-buffered coefficient slab
_VMEM_LIMIT_CAP = 48 * 1024 * 1024   # hard cap passed to the compiler


def _round_up(x, m):
    return ((x + m - 1) // m) * m


def _jacobi_abc(i, a, b):
    """Static (Python float) recurrence coefficients for Jacobi polynomials."""
    A = (2 * i + a + b - 1) * (2 * i + a + b) / (2 * i * (i + a + b))
    B = (2 * i + a + b - 1) * (a * a - b * b) / (
        2 * i * (i + a + b) * (2 * i + a + b - 2))
    C = -2 * (i + a - 1) * (i + b - 1) * (2 * i + a + b) / (
        2 * i * (i + a + b) * (2 * i + a + b - 2))
    return float(A), float(B), float(C)


def _layout_params(input_dim, output_dim, degree):
    """Static layout decisions shared by weight prep and the forward call."""
    k = (degree + 1) * input_dim
    k_pad = _round_up(k, 8)                       # f32 sublane multiple
    out_pad = max(128, _round_up(output_dim, 128))
    # Keep the full coefficient slab VMEM-resident when it fits the weight
    # budget; otherwise tile the output columns (inner grid axis).
    if 2 * k_pad * out_pad * 4 <= _WEIGHT_BUDGET:
        tn = out_pad
    else:
        tn = max(128, (_WEIGHT_BUDGET // (2 * k_pad * 4)) // 128 * 128)
        out_pad = _round_up(out_pad, tn)
    return k, k_pad, out_pad, tn


def prepare_kan_weights(jacobi_coeffs, *, degree):
    """Pre-transpose + pad the coefficients once per layer (hoisted out of the
    per-call path).  Returns a (k_pad, out_pad) f32 matrix whose K axis is
    degree-major / input-minor, matching the in-kernel basis layout."""
    input_dim, output_dim, dp1 = jacobi_coeffs.shape
    assert dp1 == degree + 1
    k, k_pad, out_pad, _ = _layout_params(input_dim, output_dim, degree)
    w = jnp.transpose(jacobi_coeffs, (2, 0, 1)).astype(jnp.float32)  # (D+1,I,O)
    w = jnp.reshape(w, (k, output_dim))                              # (K, O)
    w = jnp.pad(w, ((0, k_pad - k), (0, out_pad - output_dim)))
    return w


def _make_kan_kernel(degree, a, b, input_dim, k, k_pad):
    def kernel(x_ref, w_ref, out_ref, basis_ref):
        # x_ref:     (tile, input_dim)   row tile of the flattened input
        # w_ref:     (k_pad, tn)         stacked Jacobi coefficients
        # out_ref:   (tile, tn)
        # basis_ref: (tile, k_pad)       stacked-basis scratch (persists)

        # Build the basis once per row tile; reuse it across all output-column
        # blocks (inner "arbitrary" grid axis runs j = 0..n-1 sequentially).
        @pl.when(pl.program_id(1) == 0)
        def _():
            t = jnp.tanh(x_ref[...])                        # (tile, I), EUP
            rows = t.shape[0]
            if k_pad > k:                                   # zero the pad cols
                basis_ref[:, k:k_pad] = jnp.zeros((rows, k_pad - k),
                                                  jnp.float32)
            basis_ref[:, 0:input_dim] = jnp.ones_like(t)    # P_0 = 1
            p_prev2 = jnp.ones_like(t)
            if degree >= 1:
                p_prev1 = (a - b + (a + b + 2.0) * t) * 0.5  # P_1
                basis_ref[:, input_dim:2 * input_dim] = p_prev1
                for i in range(2, degree + 1):               # static unroll
                    Ai, Bi, Ci = _jacobi_abc(i, a, b)
                    p_cur = (Ai * t + Bi) * p_prev1 + Ci * p_prev2
                    basis_ref[:, i * input_dim:(i + 1) * input_dim] = p_cur
                    p_prev2, p_prev1 = p_prev1, p_cur

        # Single fused MXU contraction over K = (degree+1)*input_dim.
        out_ref[...] = jnp.dot(
            basis_ref[...], w_ref[...],
            preferred_element_type=jnp.float32).astype(out_ref.dtype)

    return kernel


def kan_forward(x, jacobi_coeffs, *, degree, a=1.0, b=1.0,
                max_block_rows=2048, out_dtype=jnp.float32,
                prepared_weights=None):
    """Forward pass matching the PyTorch KAN module.

    x: any shape flattening to (-1, input_dim)
    jacobi_coeffs: (input_dim, output_dim, degree+1)
    returns: (rows, output_dim) in out_dtype (f32 by default; bf16 halves the
             HBM writeback if downstream tolerates it).
    """
    input_dim, output_dim, dp1 = jacobi_coeffs.shape
    assert dp1 == degree + 1
    out_itemsize = jnp.dtype(out_dtype).itemsize
    k, k_pad, out_pad, tn = _layout_params(input_dim, output_dim, degree)

    w = prepared_weights
    if w is None:
        w = prepare_kan_weights(jacobi_coeffs, degree=degree)
    assert w.shape == (k_pad, out_pad)

    x_rows = jnp.reshape(x, (-1, input_dim)).astype(jnp.float32)
    rows = x_rows.shape[0]

    # ---- row-tile selection (VMEM-aware; amortizes ~0.35 us per-step cost) --
    w_vmem = 2 * k_pad * tn * 4                              # dbuf weights
    per_row = 2 * input_dim * 4 + 2 * tn * out_itemsize + k_pad * 4
    vmem_cap = max(8, ((_VMEM_BUDGET - w_vmem) // per_row) // 8 * 8)
    tile = min(max_block_rows, vmem_cap, _round_up(rows, 8))
    # v7x occupancy: prefer >= 4 row blocks (2 cores x >= 2 pipeline steps),
    # but never shrink below 256 rows per block.
    occ_cap = _round_up((rows + 3) // 4, 8)
    tile = max(8, min(tile, max(occ_cap, 256)))
    rows_pad = _round_up(rows, tile)
    if rows_pad != rows:
        x_rows = jnp.pad(x_rows, ((0, rows_pad - rows), (0, 0)))

    grid = (rows_pad // tile, out_pad // tn)

    vmem_need = (2 * tile * input_dim * 4 + w_vmem
                 + 2 * tile * tn * out_itemsize + tile * k_pad * 4)
    vmem_limit = int(min(_VMEM_LIMIT_CAP,
                         max(32 * 1024 * 1024, vmem_need + vmem_need // 4)))

    cost = pl.CostEstimate(
        flops=2 * rows * k * output_dim,
        transcendentals=rows * input_dim,
        bytes_accessed=(rows * input_dim * 4 + k_pad * out_pad * 4
                        + rows * output_dim * out_itemsize))

    kernel = _make_kan_kernel(degree, float(a), float(b), input_dim, k, k_pad)

    out = pl.pallas_call(
        kernel,
        out_shape=jax.ShapeDtypeStruct((rows_pad, out_pad), out_dtype),
        grid=grid,
        in_specs=[
            # Row tile of the input (re-used across the inner j axis).
            pl.BlockSpec((tile, input_dim), lambda i, j: (i, 0)),
            # Coefficient slab: full K, tiled (or resident) over out columns.
            pl.BlockSpec((k_pad, tn), lambda i, j: (0, j)),
        ],
        out_specs=pl.BlockSpec((tile, tn), lambda i, j: (i, j)),
        scratch_shapes=[pltpu.VMEM((tile, k_pad), jnp.float32)],
        compiler_params=pltpu.CompilerParams(
            dimension_semantics=("parallel", "arbitrary"),
            vmem_limit_bytes=vmem_limit,
        ),
        cost_estimate=cost,
    )(x_rows, w)

    return out[:rows, :output_dim]


def kan_reference(x, jacobi_coeffs, *, degree, a=1.0, b=1.0):
    """Pure-JAX reference mirroring the PyTorch forward."""
    input_dim = jacobi_coeffs.shape[0]
    xr = jnp.tanh(jnp.reshape(x, (-1, input_dim)))
    polys = [jnp.ones_like(xr)]
    if degree >= 1:
        polys.append((a - b + (a + b + 2.0) * xr) * 0.5)
    for i in range(2, degree + 1):
        Ai, Bi, Ci = _jacobi_abc(i, a, b)
        polys.append((Ai * xr + Bi) * polys[-1] + Ci * polys[-2])
    jac = jnp.stack(polys, axis=-1)                       # (rows, I, D+1)
    return jnp.einsum('bid,iod->bo', jac, jacobi_coeffs)


if __name__ == "__main__":
    input_dim, output_dim, degree = 4, 32, 3
    a_param, b_param = 1.0, 1.0

    key = jax.random.PRNGKey(0)
    k_x, k_c = jax.random.split(key)
    x = jax.random.normal(k_x, (2, 4, 16, 16), dtype=jnp.float32)
    std = 1.0 / (input_dim * (degree + 1))
    jacobi_coeffs = (std * jax.random.normal(
        k_c, (input_dim, output_dim, degree + 1))).astype(jnp.float32)

    # Weight transpose/pad hoisted out of the per-call path (done once).
    w_prepped = prepare_kan_weights(jacobi_coeffs, degree=degree)

    out = kan_forward(x, jacobi_coeffs, degree=degree, a=a_param, b=b_param,
                      prepared_weights=w_prepped)
    out = jax.block_until_ready(out)

    rows = x.size // input_dim
    assert out.shape == (rows, output_dim)

    ref = kan_reference(x, jacobi_coeffs, degree=degree, a=a_param, b=b_param)
    assert jnp.allclose(out, ref, atol=1e-3, rtol=1e-3)

    print("KERNEL_OK")
</pallas_src>

<mosaic_0001>
module attributes {stable_mosaic.version = 11 : i64} {
  func.func @kernel(%arg0: i32, %arg1: i32, %arg2: memref<256x4xf32, #tpu.memory_space<vmem>>, %arg3: memref<16x128xf32, #tpu.memory_space<vmem>>, %arg4: memref<256x128xf32, #tpu.memory_space<vmem>>, %arg5: memref<256x16xf32, #tpu.memory_space<vmem>>) attributes {dimension_semantics = [#tpu.dimension_semantics<parallel>, #tpu.dimension_semantics<arbitrary>], iteration_bounds = array<i64: 2, 1>, scalar_prefetch = 0 : i64, scratch_operands = 1 : i64, tpu.core_type = #tpu.core_type<tc>, window_params = [{transform_indices = @transform_0, window_bounds = array<i64: 256, 4>}, {transform_indices = @transform_1, window_bounds = array<i64: 16, 128>}, {transform_indices = @transform_2, window_bounds = array<i64: 256, 128>}]} {
    %c0_i32 = arith.constant 0 : i32
    %0 = arith.cmpi eq, %arg1, %c0_i32 : i32
    %1 = arith.extui %0 : i1 to i32
    %c0_i32_0 = arith.constant 0 : i32
    %2 = arith.cmpi ne, %1, %c0_i32_0 : i32
    scf.if %2 {
      %c0_6 = arith.constant 0 : index
      %c0_7 = arith.constant 0 : index
      %7 = vector.load %arg2[%c0_6, %c0_7] : memref<256x4xf32, #tpu.memory_space<vmem>>, vector<256x4xf32>
      %8 = math.tanh %7 : vector<256x4xf32>
      %cst_8 = arith.constant 1.000000e+00 : f32
      %9 = vector.broadcast %cst_8 : f32 to vector<256x4xf32>
      %c0_9 = arith.constant 0 : index
      %c0_10 = arith.constant 0 : index
      %10 = vector.load %arg5[%c0_9, %c0_10] : memref<256x16xf32, #tpu.memory_space<vmem>>, vector<256x4xf32>
      tpu.vector_store %arg5[%c0_9, %c0_10], %9 {strides = array<i32>} : memref<256x16xf32, #tpu.memory_space<vmem>>, vector<256x4xf32>,
      %cst_11 = arith.constant 1.000000e+00 : f32
      %11 = vector.broadcast %cst_11 : f32 to vector<256x4xf32>
      %cst_12 = arith.constant 4.000000e+00 : f32
      %12 = vector.broadcast %cst_12 : f32 to vector<256x4xf32>
      %13 = arith.mulf %12, %8 : vector<256x4xf32>
      %cst_13 = arith.constant 0.000000e+00 : f32
      %14 = vector.broadcast %cst_13 : f32 to vector<256x4xf32>
      %15 = arith.addf %14, %13 : vector<256x4xf32>
      %cst_14 = arith.constant 5.000000e-01 : f32
      %16 = vector.broadcast %cst_14 : f32 to vector<256x4xf32>
      %17 = arith.mulf %15, %16 : vector<256x4xf32>
      %c0_15 = arith.constant 0 : index
      %c4 = arith.constant 4 : index
      %18 = vector.load %arg5[%c0_15, %c4] : memref<256x16xf32, #tpu.memory_space<vmem>>, vector<256x4xf32>
      tpu.vector_store %arg5[%c0_15, %c4], %17 {strides = array<i32>} : memref<256x16xf32, #tpu.memory_space<vmem>>, vector<256x4xf32>,
      %cst_16 = arith.constant 1.875000e+00 : f32
      %19 = vector.broadcast %cst_16 : f32 to vector<256x4xf32>
      %20 = arith.mulf %19, %8 : vector<256x4xf32>
      %cst_17 = arith.constant 0.000000e+00 : f32
      %21 = vector.broadcast %cst_17 : f32 to vector<256x4xf32>
      %22 = arith.addf %20, %21 : vector<256x4xf32>
      %23 = arith.mulf %22, %17 : vector<256x4xf32>
      %cst_18 = arith.constant -7.500000e-01 : f32
      %24 = vector.broadcast %cst_18 : f32 to vector<256x4xf32>
      %25 = arith.mulf %24, %11 : vector<256x4xf32>
      %26 = arith.addf %23, %25 : vector<256x4xf32>
      %c0_19 = arith.constant 0 : index
      %c8 = arith.constant 8 : index
      %27 = vector.load %arg5[%c0_19, %c8] : memref<256x16xf32, #tpu.memory_space<vmem>>, vector<256x4xf32>
      tpu.vector_store %arg5[%c0_19, %c8], %26 {strides = array<i32>} : memref<256x16xf32, #tpu.memory_space<vmem>>, vector<256x4xf32>,
      %cst_20 = arith.constant 1.86666667 : f32
      %28 = vector.broadcast %cst_20 : f32 to vector<256x4xf32>
      %29 = arith.mulf %28, %8 : vector<256x4xf32>
      %cst_21 = arith.constant 0.000000e+00 : f32
      %30 = vector.broadcast %cst_21 : f32 to vector<256x4xf32>
      %31 = arith.addf %29, %30 : vector<256x4xf32>
      %32 = arith.mulf %31, %26 : vector<256x4xf32>
      %cst_22 = arith.constant -8.000000e-01 : f32
      %33 = vector.broadcast %cst_22 : f32 to vector<256x4xf32>
      %34 = arith.mulf %33, %17 : vector<256x4xf32>
      %35 = arith.addf %32, %34 : vector<256x4xf32>
      %c0_23 = arith.constant 0 : index
      %c12 = arith.constant 12 : index
      %36 = vector.load %arg5[%c0_23, %c12] : memref<256x16xf32, #tpu.memory_space<vmem>>, vector<256x4xf32>
      tpu.vector_store %arg5[%c0_23, %c12], %35 {strides = array<i32>} : memref<256x16xf32, #tpu.memory_space<vmem>>, vector<256x4xf32>,
    } else {
    }
    %c0 = arith.constant 0 : index
    %c0_1 = arith.constant 0 : index
    %3 = vector.load %arg5[%c0, %c0_1] : memref<256x16xf32, #tpu.memory_space<vmem>>, vector<256x16xf32>
    %c0_2 = arith.constant 0 : index
    %c0_3 = arith.constant 0 : index
    %4 = vector.load %arg3[%c0_2, %c0_3] : memref<16x128xf32, #tpu.memory_space<vmem>>, vector<16x128xf32>
    %cst = arith.constant dense<0.000000e+00> : vector<256x128xf32>
    %5 = tpu.matmul %3, %4, %cst {dimension_numbers = #tpu.dot_dimension_numbers<[1], [0], [0], [1], [0, 0, 1, 1], [], []>} : vector<256x16xf32>, vector<16x128xf32>, vector<256x128xf32> -> vector<256x128xf32>
    %c0_4 = arith.constant 0 : index
    %c0_5 = arith.constant 0 : index
    %6 = vector.load %arg4[%c0_4, %c0_5] : memref<256x128xf32, #tpu.memory_space<vmem>>, vector<256x128xf32>
    tpu.vector_store %arg4[%c0_4, %c0_5], %5 {strides = array<i32>} : memref<256x128xf32, #tpu.memory_space<vmem>>, vector<256x128xf32>,
    return
  }
  func.func @transform_0(%arg0: i32, %arg1: i32) -> (i32, i32) {
    %c0_i32 = arith.constant 0 : i32
    %c0_i32_0 = arith.constant 0 : i32
    return %arg0, %c0_i32 : i32, i32
  }
  func.func @transform_1(%arg0: i32, %arg1: i32) -> (i32, i32) {
    %c0_i32 = arith.constant 0 : i32
    %c0_i32_0 = arith.constant 0 : i32
    return %c0_i32, %arg1 : i32, i32
  }
  func.func @transform_2(%arg0: i32, %arg1: i32) -> (i32, i32) {
    %c0_i32 = arith.constant 0 : i32
    return %arg0, %arg1 : i32, i32
  }
}

</mosaic_0001>

<llo_original>
// kernel: tpu_custom_call.1
$region0: #{tpu_custom_call.1}
  #allocation0 [shape = 'u32[]', space=smem, size = 0x4, offset = 0x4, fixed_abs, tag = 'smem constant byte address 0x4 - core index']
  #allocation1 [shape = 'u32[144,128]{1,0:T(1,128)}', space=vmem, size = 0x12000, scoped, tag = 'internal scratch']
  #allocation2 [shape = 'f32[256,16]{1,0:T(8,128)}', space=vmem, size = 0x20000, scoped, tag = 'scratch operand']
  %s0 = inlined_call_operand.vmem [shape: f32[512,4], index: 0, kind: input, shape index: {}]
  %s1 = inlined_call_operand.vmem [shape: f32[16,128], index: 1, kind: input, shape index: {}]
  %s2 = inlined_call_operand.hbm [shape: f32[512,128], index: 2, kind: output, shape index: {}]
  %s3 = sld [smem:[#allocation0]]
  $region45: #{tpu_custom_call.1} parent=0
    _
  %s5 = ssub.s32 1, %s3
  %s6 = scalar_select 0, %s5, %s3
  $region1: #{tpu_custom_call.1} parent=0
    #allocation3 [shape = 'u8[262144]{0}', space=vmem, size = 0x40000, scoped, tag = 'output window, operand 0']
    #allocation4 [shape = 's32[2]{0}', space=sflag, size = 0x8, scoped, tag = 'scoped memory for tpu_custom_call.1']
    %7 = vsyncpa [#allocation4], 0
    %s8 = scalar_lea.sflag [#allocation4], 1
    %9 = vsyncpa %s8, 0
    loop: start=0, step=1, limit=4
    $region2: #{tpu_custom_call.1} parent=1 // loop_pre_header
      _
    $region3: #{tpu_custom_call.1} parent=1 // loop_header
      %s11 = sphi 0, %s15
      %p12 = scmp.ge.s32.totalorder %s11, 4
      %s18 = sphi 0, %s30
      %s19 = sphi 0, %s26
      %s20 = sphi 0, %s18
      %s21 = sphi 0, %s19
      %s22 = sphi 0, %s20
      %s23 = sphi 0, %s21
      %s33 = sphi 0, %s35
      %s36 = sphi 0, %s33
      %s37 = sphi 0, %s36
      %s53 = sphi 0, %s37
      %s59 = sphi 0, %s61
      %s62 = sphi 0, %s59
      %s63 = sphi 0, %s62
      %s79 = sphi 0, %s63
      %s87 = sphi 0, %s89
      %s90 = sphi 0, %s87
      %s91 = sphi 0, %s90
      %s107 = sphi 0, %s91
    $region4: #{tpu_custom_call.1} parent=1 // loop_header_branch
      %14 = sbr.rel (%p12) target = $region8
    $region5: #{tpu_custom_call.1} parent=1 // loop_body
      %s16 = ssub.s32 %s11, 1
      %s17 = ssub.s32 %s11, 2
      %s24 = sadd.s32 1, %s19
      %p25 = scmp.ge.s32.totalorder %s24, 1
      %s26 = scalar_select %p25, 0, %s24
      %s27 = sadd.s32 1, %s18
      %s28 = scalar_select %p25, %s27, %s18
      %p29 = scmp.ge.s32.totalorder %s28, 2
      %s30 = scalar_select %p29, 0, %s28
      %s31 = ssub.s32 %s18, %s30
      %p32 = scmp.eq.s32.totalorder %s31, 0
      %s34 = sadd.s32 %s33, 1
      %s35 = scalar_select %p32, %s33, %s34
      %p38 = pneg %p32
      %p39 = scmp.eq.s32.totalorder %s11, 1
      %p40 = por %p38, %p39
      %p41 = scmp.ne.s32.totalorder %s33, %s36
      %p42 = scmp.eq.s32.totalorder %s11, 0
      %p43 = por %p41, %p42
      %p44 = scmp.ne.s32.totalorder %s33, %s36
      %p45 = scmp.eq.s32.totalorder %s16, 1
      %p46 = por %p44, %p45
      %p47 = scmp.ne.s32.totalorder %s36, %s37
      %p48 = scmp.eq.s32.totalorder %s16, 0
      %p49 = por %p47, %p48
      %p50 = scmp.ne.s32.totalorder %s36, %s37
      %p51 = scmp.eq.s32.totalorder %s17, 1
      %p52 = por %p50, %p51
      %p54 = scmp.ne.s32.totalorder %s37, %s53
      %p55 = scmp.eq.s32.totalorder %s17, 0
      %p56 = por %p54, %p55
      %s57 = ssub.s32 %s19, %s26
      %p58 = scmp.eq.s32.totalorder %s57, 0
      %s60 = sadd.s32 %s59, 1
      %s61 = scalar_select %p58, %s59, %s60
      %p64 = pneg %p58
      %p65 = scmp.eq.s32.totalorder %s11, 1
      %p66 = por %p64, %p65
      %p67 = scmp.ne.s32.totalorder %s59, %s62
      %p68 = scmp.eq.s32.totalorder %s11, 0
      %p69 = por %p67, %p68
      %p70 = scmp.ne.s32.totalorder %s59, %s62
      %p71 = scmp.eq.s32.totalorder %s16, 1
      %p72 = por %p70, %p71
      %p73 = scmp.ne.s32.totalorder %s62, %s63
      %p74 = scmp.eq.s32.totalorder %s16, 0
      %p75 = por %p73, %p74
      %p76 = scmp.ne.s32.totalorder %s62, %s63
      %p77 = scmp.eq.s32.totalorder %s17, 1
      %p78 = por %p76, %p77
      %p80 = scmp.ne.s32.totalorder %s63, %s79
      %p81 = scmp.eq.s32.totalorder %s17, 0
      %p82 = por %p80, %p81
      %s83 = ssub.s32 %s18, %s30
      %s84 = ssub.s32 %s19, %s26
      %s85 = sor.u32 %s83, %s84
      %p86 = scmp.eq.s32.totalorder %s85, 0
      %s88 = sadd.s32 %s87, 1
      %s89 = scalar_select %p86, %s87, %s88
      %p92 = pneg %p86
      %p93 = scmp.eq.s32.totalorder %s11, 1
      %p94 = por %p92, %p93
      %p95 = scmp.ne.s32.totalorder %s87, %s90
      %p96 = scmp.eq.s32.totalorder %s11, 0
      %p97 = por %p95, %p96
      %p98 = scmp.ne.s32.totalorder %s87, %s90
      %p99 = scmp.eq.s32.totalorder %s16, 1
      %p100 = por %p98, %p99
      %p101 = scmp.ne.s32.totalorder %s90, %s91
      %p102 = scmp.eq.s32.totalorder %s16, 0
      %p103 = por %p101, %p102
      %p104 = scmp.ne.s32.totalorder %s90, %s91
      %p105 = scmp.eq.s32.totalorder %s17, 1
      %p106 = por %p104, %p105
      %p108 = scmp.ne.s32.totalorder %s91, %s107
      %p109 = scmp.eq.s32.totalorder %s17, 0
      %p110 = por %p108, %p109
      %p111 = scmp.le.s32.totalorder 1, %s11
      %p112 = scmp.lt.s32.totalorder %s11, 3
      %p113 = pnand %p111, %p112
      %p114 = pneg %p113
      // Predicated region
      $region9: #{tpu_custom_call.1} parent=5 // pred_check
        _
      $region10: #{tpu_custom_call.1} parent=5 // pred_check_branch
        %116 = sbr.rel (%p113) target = $region12
      $region11: #{tpu_custom_call.1} parent=5 // pred_region
        %s117 = ssub.s32 %s11, 1
        // Predicated region
        $region13: #{tpu_custom_call.1} parent=11 // pred_check
          %p118 = pneg %p75
        $region14: #{tpu_custom_call.1} parent=11 // pred_check_branch
          %120 = sbr.rel (%p118) target = $region16
        $region15: #{tpu_custom_call.1} parent=11 // pred_region
          %p121 = scmp.lt.s32.totalorder %s21, 0
          %s122 = scalar_select %p121, %s21, 0
          %s123 = smul.addr %s122, 8
          %s124 = scalar_lea.vmem %s1, %s123
        $region16: #{tpu_custom_call.1} parent=11 // pred_fallthru
          _
      $region12: #{tpu_custom_call.1} parent=5 // pred_fallthru
        _
      %p125 = scmp.lt.s32.totalorder %s11, 2
      // Predicated region
      $region17: #{tpu_custom_call.1} parent=5 // pred_check
        %p126 = pneg %p125
      $region18: #{tpu_custom_call.1} parent=5 // pred_check_branch
        %128 = sbr.rel (%p126) target = $region20
      $region19: #{tpu_custom_call.1} parent=5 // pred_region
        // Predicated region
        $region21: #{tpu_custom_call.1} parent=19 // pred_check
          %p129 = pneg %p43
        $region22: #{tpu_custom_call.1} parent=19 // pred_check_branch
          %131 = sbr.rel (%p129) target = $region24
        $region23: #{tpu_custom_call.1} parent=19 // pred_region
          %s132 = smul.u32 32, %s18
          %p133 = scmp.lt.s32.totalorder %s132, 63
          %s134 = scalar_select %p133, %s132, 63
          %s135 = smul.addr %s134, 8
          %s136 = scalar_lea.vmem %s0, %s135
          %s137 = smul.u32 32, %s18
        $region24: #{tpu_custom_call.1} parent=19 // pred_fallthru
          _
      $region20: #{tpu_custom_call.1} parent=5 // pred_fallthru
        _
      %p138 = scmp.le.s32.totalorder 1, %s11
      %p139 = scmp.lt.s32.totalorder %s11, 3
      %p140 = pnand %p138, %p139
      %p141 = pneg %p140
      // Predicated region
      $region25: #{tpu_custom_call.1} parent=5 // pred_check
        _
      $region26: #{tpu_custom_call.1} parent=5 // pred_check_branch
        %143 = sbr.rel (%p140) target = $region28
      $region27: #{tpu_custom_call.1} parent=5 // pred_region
        %s144 = ssub.s32 %s11, 1
        %s145 = smul.u32 32, %s20
        %p146 = scmp.lt.s32.totalorder %s145, 63
        %s147 = scalar_select %p146, %s145, 63
        %s148 = smul.addr %s147, 8
        %s149 = scalar_lea.vmem %s0, %s148
        %p150 = pneg %p49
        %p151 = pneg %p46
        %p152 = scmp.lt.s32.totalorder %s21, 0
        %s153 = scalar_select %p152, %s21, 0
        %s154 = smul.addr %s153, 8
        %s155 = scalar_lea.vmem %s1, %s154
        %p156 = pneg %p75
        %p157 = pneg %p72
        %p158 = pneg %p103
        %p159 = pneg %p100
        %s160 = sand.u32 %s90, 1
        %s161 = scalar_lea.sflag [#allocation4], %s160
        %s162 = sand.u32 %s90, 1
        %s163 = smul.addr %s162, 256
        %s164 = scalar_lea.vmem [#allocation3], %s163
        %s165 = smul.u32 32, %s20
        %p166 = scmp.lt.s32.totalorder %s165, 63
        %s167 = scalar_select %p166, %s165, 63
        %s168 = smul.addr %s167, 8
        %s169 = scalar_lea.vmem %s0, %s168
        %s170 = smul.u32 32, %s20
        %p171 = scmp.lt.s32.totalorder %s21, 0
        %s172 = scalar_select %p171, %s21, 0
        %s173 = smul.addr %s172, 8
        %s174 = scalar_lea.vmem %s1, %s173
        %s175 = smul.u32 32, %s20
        %p176 = scmp.eq.s32.totalorder %s21, 0
        // Predicated region
        $region29: #{tpu_custom_call.1} parent=27 // pred_check
          %p177 = pneg %p176
        $region30: #{tpu_custom_call.1} parent=27 // pred_check_branch
          %179 = sbr.rel (%p177) target = $region32
        $region31: #{tpu_custom_call.1} parent=27 // pred_region
          %v180 = vld [vmem:[%s169] sm:$0xff]
          %v181 = vld [vmem:[%s169 + $0x8] sm:$0xff]
          %v182 = vld [vmem:[%s169 + $0x10] sm:$0xff]
          %v183 = vld [vmem:[%s169 + $0x18] sm:$0xff]
          %v184 = vld [vmem:[%s169 + $0x20] sm:$0xff]
          %v185 = vld [vmem:[%s169 + $0x28] sm:$0xff]
          %v186 = vld [vmem:[%s169 + $0x30] sm:$0xff]
          %v187 = vld [vmem:[%s169 + $0x38] sm:$0xff]
          %v188 = vld [vmem:[%s169 + $0x40] sm:$0xff]
          %v189 = vld [vmem:[%s169 + $0x48] sm:$0xff]
          %v190 = vld [vmem:[%s169 + $0x50] sm:$0xff]
          %v191 = vld [vmem:[%s169 + $0x58] sm:$0xff]
          %v192 = vld [vmem:[%s169 + $0x60] sm:$0xff]
          %v193 = vld [vmem:[%s169 + $0x68] sm:$0xff]
          %v194 = vld [vmem:[%s169 + $0x70] sm:$0xff]
          %v195 = vld [vmem:[%s169 + $0x78] sm:$0xff]
          %v196 = vld [vmem:[%s169 + $0x80] sm:$0xff]
          %v197 = vld [vmem:[%s169 + $0x88] sm:$0xff]
          %v198 = vld [vmem:[%s169 + $0x90] sm:$0xff]
          %v199 = vld [vmem:[%s169 + $0x98] sm:$0xff]
          %v200 = vld [vmem:[%s169 + $0xa0] sm:$0xff]
          %v201 = vld [vmem:[%s169 + $0xa8] sm:$0xff]
          %v202 = vld [vmem:[%s169 + $0xb0] sm:$0xff]
          %v203 = vld [vmem:[%s169 + $0xb8] sm:$0xff]
          %v204 = vld [vmem:[%s169 + $0xc0] sm:$0xff]
          %v205 = vld [vmem:[%s169 + $0xc8] sm:$0xff]
          %v206 = vld [vmem:[%s169 + $0xd0] sm:$0xff]
          %v207 = vld [vmem:[%s169 + $0xd8] sm:$0xff]
          %v208 = vld [vmem:[%s169 + $0xe0] sm:$0xff]
          %v209 = vld [vmem:[%s169 + $0xe8] sm:$0xff]
          %v210 = vld [vmem:[%s169 + $0xf0] sm:$0xff]
          %v211 = vld [vmem:[%s169 + $0xf8] sm:$0xff]
          %v212 = vtanh.pop %v180
          %v213 = vtanh.pop %v181
          %v214 = vtanh.pop %v182
          %v215 = vtanh.pop %v183
          %v216 = vtanh.pop %v184
          %v217 = vtanh.pop %v185
          %v218 = vtanh.pop %v186
          %v219 = vtanh.pop %v187
          %v220 = vtanh.pop %v188
          %v221 = vtanh.pop %v189
          %v222 = vtanh.pop %v190
          %v223 = vtanh.pop %v191
          %v224 = vtanh.pop %v192
          %v225 = vtanh.pop %v193
          %v226 = vtanh.pop %v194
          %v227 = vtanh.pop %v195
          %v228 = vtanh.pop %v196
          %v229 = vtanh.pop %v197
          %v230 = vtanh.pop %v198
          %v231 = vtanh.pop %v199
          %v232 = vtanh.pop %v200
          %v233 = vtanh.pop %v201
          %v234 = vtanh.pop %v202
          %v235 = vtanh.pop %v203
          %v236 = vtanh.pop %v204
          %v237 = vtanh.pop %v205
          %v238 = vtanh.pop %v206
          %v239 = vtanh.pop %v207
          %v240 = vtanh.pop %v208
          %v241 = vtanh.pop %v209
          %v242 = vtanh.pop %v210
          %v243 = vtanh.pop %v211
          %vm244 = vcmask 31744
          %245 = vst.msk [vmem:[#allocation2] sm:$0xff] %vm244, 1.0
          %246 = vst.msk [vmem:[#allocation2 + $0x8] sm:$0xff] %vm244, 1.0
          %247 = vst.msk [vmem:[#allocation2 + $0x10] sm:$0xff] %vm244, 1.0
          %248 = vst.msk [vmem:[#allocation2 + $0x18] sm:$0xff] %vm244, 1.0
          %249 = vst.msk [vmem:[#allocation2 + $0x20] sm:$0xff] %vm244, 1.0
          %250 = vst.msk [vmem:[#allocation2 + $0x28] sm:$0xff] %vm244, 1.0
          %251 = vst.msk [vmem:[#allocation2 + $0x30] sm:$0xff] %vm244, 1.0
          %252 = vst.msk [vmem:[#allocation2 + $0x38] sm:$0xff] %vm244, 1.0
          %253 = vst.msk [vmem:[#allocation2 + $0x40] sm:$0xff] %vm244, 1.0
          %254 = vst.msk [vmem:[#allocation2 + $0x48] sm:$0xff] %vm244, 1.0
          %255 = vst.msk [vmem:[#allocation2 + $0x50] sm:$0xff] %vm244, 1.0
          %256 = vst.msk [vmem:[#allocation2 + $0x58] sm:$0xff] %vm244, 1.0
          %257 = vst.msk [vmem:[#allocation2 + $0x60] sm:$0xff] %vm244, 1.0
          %258 = vst.msk [vmem:[#allocation2 + $0x68] sm:$0xff] %vm244, 1.0
          %259 = vst.msk [vmem:[#allocation2 + $0x70] sm:$0xff] %vm244, 1.0
          %260 = vst.msk [vmem:[#allocation2 + $0x78] sm:$0xff] %vm244, 1.0
          %261 = vst.msk [vmem:[#allocation2 + $0x80] sm:$0xff] %vm244, 1.0
          %262 = vst.msk [vmem:[#allocation2 + $0x88] sm:$0xff] %vm244, 1.0
          %263 = vst.msk [vmem:[#allocation2 + $0x90] sm:$0xff] %vm244, 1.0
          %264 = vst.msk [vmem:[#allocation2 + $0x98] sm:$0xff] %vm244, 1.0
          %265 = vst.msk [vmem:[#allocation2 + $0xa0] sm:$0xff] %vm244, 1.0
          %266 = vst.msk [vmem:[#allocation2 + $0xa8] sm:$0xff] %vm244, 1.0
          %267 = vst.msk [vmem:[#allocation2 + $0xb0] sm:$0xff] %vm244, 1.0
          %268 = vst.msk [vmem:[#allocation2 + $0xb8] sm:$0xff] %vm244, 1.0
          %269 = vst.msk [vmem:[#allocation2 + $0xc0] sm:$0xff] %vm244, 1.0
          %270 = vst.msk [vmem:[#allocation2 + $0xc8] sm:$0xff] %vm244, 1.0
          %271 = vst.msk [vmem:[#allocation2 + $0xd0] sm:$0xff] %vm244, 1.0
          %272 = vst.msk [vmem:[#allocation2 + $0xd8] sm:$0xff] %vm244, 1.0
          %273 = vst.msk [vmem:[#allocation2 + $0xe0] sm:$0xff] %vm244, 1.0
          %274 = vst.msk [vmem:[#allocation2 + $0xe8] sm:$0xff] %vm244, 1.0
          %275 = vst.msk [vmem:[#allocation2 + $0xf0] sm:$0xff] %vm244, 1.0
          %276 = vst.msk [vmem:[#allocation2 + $0xf8] sm:$0xff] %vm244, 1.0
          %v277 = vmul.f32 %v212, 4.0
          %v278 = vmul.f32 %v213, 4.0
          %v279 = vmul.f32 %v214, 4.0
          %v280 = vmul.f32 %v215, 4.0
          %v281 = vmul.f32 %v216, 4.0
          %v282 = vmul.f32 %v217, 4.0
          %v283 = vmul.f32 %v218, 4.0
          %v284 = vmul.f32 %v219, 4.0
          %v285 = vmul.f32 %v220, 4.0
          %v286 = vmul.f32 %v221, 4.0
          %v287 = vmul.f32 %v222, 4.0
          %v288 = vmul.f32 %v223, 4.0
          %v289 = vmul.f32 %v224, 4.0
          %v290 = vmul.f32 %v225, 4.0
          %v291 = vmul.f32 %v226, 4.0
          %v292 = vmul.f32 %v227, 4.0
          %v293 = vmul.f32 %v228, 4.0
          %v294 = vmul.f32 %v229, 4.0
          %v295 = vmul.f32 %v230, 4.0
          %v296 = vmul.f32 %v231, 4.0
          %v297 = vmul.f32 %v232, 4.0
          %v298 = vmul.f32 %v233, 4.0
          %v299 = vmul.f32 %v234, 4.0
          %v300 = vmul.f32 %v235, 4.0
          %v301 = vmul.f32 %v236, 4.0
          %v302 = vmul.f32 %v237, 4.0
          %v303 = vmul.f32 %v238, 4.0
          %v304 = vmul.f32 %v239, 4.0
          %v305 = vmul.f32 %v240, 4.0
          %v306 = vmul.f32 %v241, 4.0
          %v307 = vmul.f32 %v242, 4.0
          %v308 = vmul.f32 %v243, 4.0
          %v309 = vadd.f32 %v277, 0.0
          %v310 = vadd.f32 %v278, 0.0
          %v311 = vadd.f32 %v279, 0.0
          %v312 = vadd.f32 %v280, 0.0
          %v313 = vadd.f32 %v281, 0.0
          %v314 = vadd.f32 %v282, 0.0
          %v315 = vadd.f32 %v283, 0.0
          %v316 = vadd.f32 %v284, 0.0
          %v317 = vadd.f32 %v285, 0.0
          %v318 = vadd.f32 %v286, 0.0
          %v319 = vadd.f32 %v287, 0.0
          %v320 = vadd.f32 %v288, 0.0
          %v321 = vadd.f32 %v289, 0.0
          %v322 = vadd.f32 %v290, 0.0
          %v323 = vadd.f32 %v291, 0.0
          %v324 = vadd.f32 %v292, 0.0
          %v325 = vadd.f32 %v293, 0.0
          %v326 = vadd.f32 %v294, 0.0
          %v327 = vadd.f32 %v295, 0.0
          %v328 = vadd.f32 %v296, 0.0
          %v329 = vadd.f32 %v297, 0.0
          %v330 = vadd.f32 %v298, 0.0
          %v331 = vadd.f32 %v299, 0.0
          %v332 = vadd.f32 %v300, 0.0
          %v333 = vadd.f32 %v301, 0.0
          %v334 = vadd.f32 %v302, 0.0
          %v335 = vadd.f32 %v303, 0.0
          %v336 = vadd.f32 %v304, 0.0
          %v337 = vadd.f32 %v305, 0.0
          %v338 = vadd.f32 %v306, 0.0
          %v339 = vadd.f32 %v307, 0.0
          %v340 = vadd.f32 %v308, 0.0
          %v341 = vmul.f32 %v309, 0.5
          %v342 = vmul.f32 %v310, 0.5
          %v343 = vmul.f32 %v311, 0.5
          %v344 = vmul.f32 %v312, 0.5
          %v345 = vmul.f32 %v313, 0.5
          %v346 = vmul.f32 %v314, 0.5
          %v347 = vmul.f32 %v315, 0.5
          %v348 = vmul.f32 %v316, 0.5
          %v349 = vmul.f32 %v317, 0.5
          %v350 = vmul.f32 %v318, 0.5
          %v351 = vmul.f32 %v319, 0.5
          %v352 = vmul.f32 %v320, 0.5
          %v353 = vmul.f32 %v321, 0.5
          %v354 = vmul.f32 %v322, 0.5
          %v355 = vmul.f32 %v323, 0.5
          %v356 = vmul.f32 %v324, 0.5
          %v357 = vmul.f32 %v325, 0.5
          %v358 = vmul.f32 %v326, 0.5
          %v359 = vmul.f32 %v327, 0.5
          %v360 = vmul.f32 %v328, 0.5
          %v361 = vmul.f32 %v329, 0.5
          %v362 = vmul.f32 %v330, 0.5
          %v363 = vmul.f32 %v331, 0.5
          %v364 = vmul.f32 %v332, 0.5
          %v365 = vmul.f32 %v333, 0.5
          %v366 = vmul.f32 %v334, 0.5
          %v367 = vmul.f32 %v335, 0.5
          %v368 = vmul.f32 %v336, 0.5
          %v369 = vmul.f32 %v337, 0.5
          %v370 = vmul.f32 %v338, 0.5
          %v371 = vmul.f32 %v339, 0.5
          %v372 = vmul.f32 %v340, 0.5
          %405 = vrot.lane.b32.xlu0 %v341, 4
          %v406 = vpop.permute.xlu0 %405
          %407 = vrot.lane.b32.xlu0 %v342, 4
          %v408 = vpop.permute.xlu0 %407
          %409 = vrot.lane.b32.xlu0 %v343, 4
          %v410 = vpop.permute.xlu0 %409
          %411 = vrot.lane.b32.xlu0 %v344, 4
          %v412 = vpop.permute.xlu0 %411
          %413 = vrot.lane.b32.xlu0 %v345, 4
          %v414 = vpop.permute.xlu0 %413
          %415 = vrot.lane.b32.xlu0 %v346, 4
          %v416 = vpop.permute.xlu0 %415
          %417 = vrot.lane.b32.xlu0 %v347, 4
          %v418 = vpop.permute.xlu0 %417
          %419 = vrot.lane.b32.xlu0 %v348, 4
          %v420 = vpop.permute.xlu0 %419
          %421 = vrot.lane.b32.xlu0 %v349, 4
          %v422 = vpop.permute.xlu0 %421
          %423 = vrot.lane.b32.xlu0 %v350, 4
          %v424 = vpop.permute.xlu0 %423
          %425 = vrot.lane.b32.xlu0 %v351, 4
          %v426 = vpop.permute.xlu0 %425
          %427 = vrot.lane.b32.xlu0 %v352, 4
          %v428 = vpop.permute.xlu0 %427
          %429 = vrot.lane.b32.xlu0 %v353, 4
          %v430 = vpop.permute.xlu0 %429
          %431 = vrot.lane.b32.xlu0 %v354, 4
          %v432 = vpop.permute.xlu0 %431
          %433 = vrot.lane.b32.xlu0 %v355, 4
          %v434 = vpop.permute.xlu0 %433
          %435 = vrot.lane.b32.xlu0 %v356, 4
          %v436 = vpop.permute.xlu0 %435
          %437 = vrot.lane.b32.xlu0 %v357, 4
          %v438 = vpop.permute.xlu0 %437
          %439 = vrot.lane.b32.xlu0 %v358, 4
          %v440 = vpop.permute.xlu0 %439
          %441 = vrot.lane.b32.xlu0 %v359, 4
          %v442 = vpop.permute.xlu0 %441
          %443 = vrot.lane.b32.xlu0 %v360, 4
          %v444 = vpop.permute.xlu0 %443
          %445 = vrot.lane.b32.xlu0 %v361, 4
          %v446 = vpop.permute.xlu0 %445
          %447 = vrot.lane.b32.xlu0 %v362, 4
          %v448 = vpop.permute.xlu0 %447
          %449 = vrot.lane.b32.xlu0 %v363, 4
          %v450 = vpop.permute.xlu0 %449
          %451 = vrot.lane.b32.xlu0 %v364, 4
          %v452 = vpop.permute.xlu0 %451
          %453 = vrot.lane.b32.xlu0 %v365, 4
          %v454 = vpop.permute.xlu0 %453
          %455 = vrot.lane.b32.xlu0 %v366, 4
          %v456 = vpop.permute.xlu0 %455
          %457 = vrot.lane.b32.xlu0 %v367, 4
          %v458 = vpop.permute.xlu0 %457
          %459 = vrot.lane.b32.xlu0 %v368, 4
          %v460 = vpop.permute.xlu0 %459
          %461 = vrot.lane.b32.xlu0 %v369, 4
          %v462 = vpop.permute.xlu0 %461
          %463 = vrot.lane.b32.xlu0 %v370, 4
          %v464 = vpop.permute.xlu0 %463
          %465 = vrot.lane.b32.xlu0 %v371, 4
          %v466 = vpop.permute.xlu0 %465
          %467 = vrot.lane.b32.xlu0 %v372, 4
          %v468 = vpop.permute.xlu0 %467
          %vm501 = vcmask 64544
          %502 = vst.msk [vmem:[#allocation2] sm:$0xff] %vm501, %v406
          %503 = vst.msk [vmem:[#allocation2 + $0x8] sm:$0xff] %vm501, %v408
          %504 = vst.msk [vmem:[#allocation2 + $0x10] sm:$0xff] %vm501, %v410
          %505 = vst.msk [vmem:[#allocation2 + $0x18] sm:$0xff] %vm501, %v412
          %506 = vst.msk [vmem:[#allocation2 + $0x20] sm:$0xff] %vm501, %v414
          %507 = vst.msk [vmem:[#allocation2 + $0x28] sm:$0xff] %vm501, %v416
          %508 = vst.msk [vmem:[#allocation2 + $0x30] sm:$0xff] %vm501, %v418
          %509 = vst.msk [vmem:[#allocation2 + $0x38] sm:$0xff] %vm501, %v420
          %510 = vst.msk [vmem:[#allocation2 + $0x40] sm:$0xff] %vm501, %v422
          %511 = vst.msk [vmem:[#allocation2 + $0x48] sm:$0xff] %vm501, %v424
          %512 = vst.msk [vmem:[#allocation2 + $0x50] sm:$0xff] %vm501, %v426
          %513 = vst.msk [vmem:[#allocation2 + $0x58] sm:$0xff] %vm501, %v428
          %514 = vst.msk [vmem:[#allocation2 + $0x60] sm:$0xff] %vm501, %v430
          %515 = vst.msk [vmem:[#allocation2 + $0x68] sm:$0xff] %vm501, %v432
          %516 = vst.msk [vmem:[#allocation2 + $0x70] sm:$0xff] %vm501, %v434
          %517 = vst.msk [vmem:[#allocation2 + $0x78] sm:$0xff] %vm501, %v436
          %518 = vst.msk [vmem:[#allocation2 + $0x80] sm:$0xff] %vm501, %v438
          %519 = vst.msk [vmem:[#allocation2 + $0x88] sm:$0xff] %vm501, %v440
          %520 = vst.msk [vmem:[#allocation2 + $0x90] sm:$0xff] %vm501, %v442
          %521 = vst.msk [vmem:[#allocation2 + $0x98] sm:$0xff] %vm501, %v444
          %522 = vst.msk [vmem:[#allocation2 + $0xa0] sm:$0xff] %vm501, %v446
          %523 = vst.msk [vmem:[#allocation2 + $0xa8] sm:$0xff] %vm501, %v448
          %524 = vst.msk [vmem:[#allocation2 + $0xb0] sm:$0xff] %vm501, %v450
          %525 = vst.msk [vmem:[#allocation2 + $0xb8] sm:$0xff] %vm501, %v452
          %526 = vst.msk [vmem:[#allocation2 + $0xc0] sm:$0xff] %vm501, %v454
          %527 = vst.msk [vmem:[#allocation2 + $0xc8] sm:$0xff] %vm501, %v456
          %528 = vst.msk [vmem:[#allocation2 + $0xd0] sm:$0xff] %vm501, %v458
          %529 = vst.msk [vmem:[#allocation2 + $0xd8] sm:$0xff] %vm501, %v460
          %530 = vst.msk [vmem:[#allocation2 + $0xe0] sm:$0xff] %vm501, %v462
          %531 = vst.msk [vmem:[#allocation2 + $0xe8] sm:$0xff] %vm501, %v464
          %532 = vst.msk [vmem:[#allocation2 + $0xf0] sm:$0xff] %vm501, %v466
          %533 = vst.msk [vmem:[#allocation2 + $0xf8] sm:$0xff] %vm501, %v468
          %v534 = vmul.f32 %v212, 1.875
          %v535 = vmul.f32 %v213, 1.875
          %v536 = vmul.f32 %v214, 1.875
          %v537 = vmul.f32 %v215, 1.875
          %v538 = vmul.f32 %v216, 1.875
          %v539 = vmul.f32 %v217, 1.875
          %v540 = vmul.f32 %v218, 1.875
          %v541 = vmul.f32 %v219, 1.875
          %v542 = vmul.f32 %v220, 1.875
          %v543 = vmul.f32 %v221, 1.875
          %v544 = vmul.f32 %v222, 1.875
          %v545 = vmul.f32 %v223, 1.875
          %v546 = vmul.f32 %v224, 1.875
          %v547 = vmul.f32 %v225, 1.875
          %v548 = vmul.f32 %v226, 1.875
          %v549 = vmul.f32 %v227, 1.875
          %v550 = vmul.f32 %v228, 1.875
          %v551 = vmul.f32 %v229, 1.875
          %v552 = vmul.f32 %v230, 1.875
          %v553 = vmul.f32 %v231, 1.875
          %v554 = vmul.f32 %v232, 1.875
          %v555 = vmul.f32 %v233, 1.875
          %v556 = vmul.f32 %v234, 1.875
          %v557 = vmul.f32 %v235, 1.875
          %v558 = vmul.f32 %v236, 1.875
          %v559 = vmul.f32 %v237, 1.875
          %v560 = vmul.f32 %v238, 1.875
          %v561 = vmul.f32 %v239, 1.875
          %v562 = vmul.f32 %v240, 1.875
          %v563 = vmul.f32 %v241, 1.875
          %v564 = vmul.f32 %v242, 1.875
          %v565 = vmul.f32 %v243, 1.875
          %v566 = vadd.f32 %v534, 0.0
          %v567 = vadd.f32 %v535, 0.0
          %v568 = vadd.f32 %v536, 0.0
          %v569 = vadd.f32 %v537, 0.0
          %v570 = vadd.f32 %v538, 0.0
          %v571 = vadd.f32 %v539, 0.0
          %v572 = vadd.f32 %v540, 0.0
          %v573 = vadd.f32 %v541, 0.0
          %v574 = vadd.f32 %v542, 0.0
          %v575 = vadd.f32 %v543, 0.0
          %v576 = vadd.f32 %v544, 0.0
          %v577 = vadd.f32 %v545, 0.0
          %v578 = vadd.f32 %v546, 0.0
          %v579 = vadd.f32 %v547, 0.0
          %v580 = vadd.f32 %v548, 0.0
          %v581 = vadd.f32 %v549, 0.0
          %v582 = vadd.f32 %v550, 0.0
          %v583 = vadd.f32 %v551, 0.0
          %v584 = vadd.f32 %v552, 0.0
          %v585 = vadd.f32 %v553, 0.0
          %v586 = vadd.f32 %v554, 0.0
          %v587 = vadd.f32 %v555, 0.0
          %v588 = vadd.f32 %v556, 0.0
          %v589 = vadd.f32 %v557, 0.0
          %v590 = vadd.f32 %v558, 0.0
          %v591 = vadd.f32 %v559, 0.0
          %v592 = vadd.f32 %v560, 0.0
          %v593 = vadd.f32 %v561, 0.0
          %v594 = vadd.f32 %v562, 0.0
          %v595 = vadd.f32 %v563, 0.0
          %v596 = vadd.f32 %v564, 0.0
          %v597 = vadd.f32 %v565, 0.0
          %v598 = vmul.f32 %v566, %v341
          %v599 = vmul.f32 %v567, %v342
          %v600 = vmul.f32 %v568, %v343
          %v601 = vmul.f32 %v569, %v344
          %v602 = vmul.f32 %v570, %v345
          %v603 = vmul.f32 %v571, %v346
          %v604 = vmul.f32 %v572, %v347
          %v605 = vmul.f32 %v573, %v348
          %v606 = vmul.f32 %v574, %v349
          %v607 = vmul.f32 %v575, %v350
          %v608 = vmul.f32 %v576, %v351
          %v609 = vmul.f32 %v577, %v352
          %v610 = vmul.f32 %v578, %v353
          %v611 = vmul.f32 %v579, %v354
          %v612 = vmul.f32 %v580, %v355
          %v613 = vmul.f32 %v581, %v356
          %v614 = vmul.f32 %v582, %v357
          %v615 = vmul.f32 %v583, %v358
          %v616 = vmul.f32 %v584, %v359
          %v617 = vmul.f32 %v585, %v360
          %v618 = vmul.f32 %v586, %v361
          %v619 = vmul.f32 %v587, %v362
          %v620 = vmul.f32 %v588, %v363
          %v621 = vmul.f32 %v589, %v364
          %v622 = vmul.f32 %v590, %v365
          %v623 = vmul.f32 %v591, %v366
          %v624 = vmul.f32 %v592, %v367
          %v625 = vmul.f32 %v593, %v368
          %v626 = vmul.f32 %v594, %v369
          %v627 = vmul.f32 %v595, %v370
          %v628 = vmul.f32 %v596, %v371
          %v629 = vmul.f32 %v597, %v372
          %v630 = vadd.f32 %v598, -0.75
          %v631 = vadd.f32 %v599, -0.75
          %v632 = vadd.f32 %v600, -0.75
          %v633 = vadd.f32 %v601, -0.75
          %v634 = vadd.f32 %v602, -0.75
          %v635 = vadd.f32 %v603, -0.75
          %v636 = vadd.f32 %v604, -0.75
          %v637 = vadd.f32 %v605, -0.75
          %v638 = vadd.f32 %v606, -0.75
          %v639 = vadd.f32 %v607, -0.75
          %v640 = vadd.f32 %v608, -0.75
          %v641 = vadd.f32 %v609, -0.75
          %v642 = vadd.f32 %v610, -0.75
          %v643 = vadd.f32 %v611, -0.75
          %v644 = vadd.f32 %v612, -0.75
          %v645 = vadd.f32 %v613, -0.75
          %v646 = vadd.f32 %v614, -0.75
          %v647 = vadd.f32 %v615, -0.75
          %v648 = vadd.f32 %v616, -0.75
          %v649 = vadd.f32 %v617, -0.75
          %v650 = vadd.f32 %v618, -0.75
          %v651 = vadd.f32 %v619, -0.75
          %v652 = vadd.f32 %v620, -0.75
          %v653 = vadd.f32 %v621, -0.75
          %v654 = vadd.f32 %v622, -0.75
          %v655 = vadd.f32 %v623, -0.75
          %v656 = vadd.f32 %v624, -0.75
          %v657 = vadd.f32 %v625, -0.75
          %v658 = vadd.f32 %v626, -0.75
          %v659 = vadd.f32 %v627, -0.75
          %v660 = vadd.f32 %v628, -0.75
          %v661 = vadd.f32 %v629, -0.75
          %694 = vrot.lane.b32.xlu0 %v630, 8
          %v695 = vpop.permute.xlu0 %694
          %696 = vrot.lane.b32.xlu0 %v631, 8
          %v697 = vpop.permute.xlu0 %696
          %698 = vrot.lane.b32.xlu0 %v632, 8
          %v699 = vpop.permute.xlu0 %698
          %700 = vrot.lane.b32.xlu0 %v633, 8
          %v701 = vpop.permute.xlu0 %700
          %702 = vrot.lane.b32.xlu0 %v634, 8
          %v703 = vpop.permute.xlu0 %702
          %704 = vrot.lane.b32.xlu0 %v635, 8
          %v705 = vpop.permute.xlu0 %704
          %706 = vrot.lane.b32.xlu0 %v636, 8
          %v707 = vpop.permute.xlu0 %706
          %708 = vrot.lane.b32.xlu0 %v637, 8
          %v709 = vpop.permute.xlu0 %708
          %710 = vrot.lane.b32.xlu0 %v638, 8
          %v711 = vpop.permute.xlu0 %710
          %712 = vrot.lane.b32.xlu0 %v639, 8
          %v713 = vpop.permute.xlu0 %712
          %714 = vrot.lane.b32.xlu0 %v640, 8
          %v715 = vpop.permute.xlu0 %714
          %716 = vrot.lane.b32.xlu0 %v641, 8
          %v717 = vpop.permute.xlu0 %716
          %718 = vrot.lane.b32.xlu0 %v642, 8
          %v719 = vpop.permute.xlu0 %718
          %720 = vrot.lane.b32.xlu0 %v643, 8
          %v721 = vpop.permute.xlu0 %720
          %722 = vrot.lane.b32.xlu0 %v644, 8
          %v723 = vpop.permute.xlu0 %722
          %724 = vrot.lane.b32.xlu0 %v645, 8
          %v725 = vpop.permute.xlu0 %724
          %726 = vrot.lane.b32.xlu0 %v646, 8
          %v727 = vpop.permute.xlu0 %726
          %728 = vrot.lane.b32.xlu0 %v647, 8
          %v729 = vpop.permute.xlu0 %728
          %730 = vrot.lane.b32.xlu0 %v648, 8
          %v731 = vpop.permute.xlu0 %730
          %732 = vrot.lane.b32.xlu0 %v649, 8
          %v733 = vpop.permute.xlu0 %732
          %734 = vrot.lane.b32.xlu0 %v650, 8
          %v735 = vpop.permute.xlu0 %734
          %736 = vrot.lane.b32.xlu0 %v651, 8
          %v737 = vpop.permute.xlu0 %736
          %738 = vrot.lane.b32.xlu0 %v652, 8
          %v739 = vpop.permute.xlu0 %738
          %740 = vrot.lane.b32.xlu0 %v653, 8
          %v741 = vpop.permute.xlu0 %740
          %742 = vrot.lane.b32.xlu0 %v654, 8
          %v743 = vpop.permute.xlu0 %742
          %744 = vrot.lane.b32.xlu0 %v655, 8
          %v745 = vpop.permute.xlu0 %744
          %746 = vrot.lane.b32.xlu0 %v656, 8
          %v747 = vpop.permute.xlu0 %746
          %748 = vrot.lane.b32.xlu0 %v657, 8
          %v749 = vpop.permute.xlu0 %748
          %750 = vrot.lane.b32.xlu0 %v658, 8
          %v751 = vpop.permute.xlu0 %750
          %752 = vrot.lane.b32.xlu0 %v659, 8
          %v753 = vpop.permute.xlu0 %752
          %754 = vrot.lane.b32.xlu0 %v660, 8
          %v755 = vpop.permute.xlu0 %754
          %756 = vrot.lane.b32.xlu0 %v661, 8
          %v757 = vpop.permute.xlu0 %756
          %vm790 = vcmask 97344
          %791 = vst.msk [vmem:[#allocation2] sm:$0xff] %vm790, %v695
          %792 = vst.msk [vmem:[#allocation2 + $0x8] sm:$0xff] %vm790, %v697
          %793 = vst.msk [vmem:[#allocation2 + $0x10] sm:$0xff] %vm790, %v699
          %794 = vst.msk [vmem:[#allocation2 + $0x18] sm:$0xff] %vm790, %v701
          %795 = vst.msk [vmem:[#allocation2 + $0x20] sm:$0xff] %vm790, %v703
          %796 = vst.msk [vmem:[#allocation2 + $0x28] sm:$0xff] %vm790, %v705
          %797 = vst.msk [vmem:[#allocation2 + $0x30] sm:$0xff] %vm790, %v707
          %798 = vst.msk [vmem:[#allocation2 + $0x38] sm:$0xff] %vm790, %v709
          %799 = vst.msk [vmem:[#allocation2 + $0x40] sm:$0xff] %vm790, %v711
          %800 = vst.msk [vmem:[#allocation2 + $0x48] sm:$0xff] %vm790, %v713
          %801 = vst.msk [vmem:[#allocation2 + $0x50] sm:$0xff] %vm790, %v715
          %802 = vst.msk [vmem:[#allocation2 + $0x58] sm:$0xff] %vm790, %v717
          %803 = vst.msk [vmem:[#allocation2 + $0x60] sm:$0xff] %vm790, %v719
          %804 = vst.msk [vmem:[#allocation2 + $0x68] sm:$0xff] %vm790, %v721
          %805 = vst.msk [vmem:[#allocation2 + $0x70] sm:$0xff] %vm790, %v723
          %806 = vst.msk [vmem:[#allocation2 + $0x78] sm:$0xff] %vm790, %v725
          %807 = vst.msk [vmem:[#allocation2 + $0x80] sm:$0xff] %vm790, %v727
          %808 = vst.msk [vmem:[#allocation2 + $0x88] sm:$0xff] %vm790, %v729
          %809 = vst.msk [vmem:[#allocation2 + $0x90] sm:$0xff] %vm790, %v731
          %810 = vst.msk [vmem:[#allocation2 + $0x98] sm:$0xff] %vm790, %v733
          %811 = vst.msk [vmem:[#allocation2 + $0xa0] sm:$0xff] %vm790, %v735
          %812 = vst.msk [vmem:[#allocation2 + $0xa8] sm:$0xff] %vm790, %v737
          %813 = vst.msk [vmem:[#allocation2 + $0xb0] sm:$0xff] %vm790, %v739
          %814 = vst.msk [vmem:[#allocation2 + $0xb8] sm:$0xff] %vm790, %v741
          %815 = vst.msk [vmem:[#allocation2 + $0xc0] sm:$0xff] %vm790, %v743
          %816 = vst.msk [vmem:[#allocation2 + $0xc8] sm:$0xff] %vm790, %v745
          %817 = vst.msk [vmem:[#allocation2 + $0xd0] sm:$0xff] %vm790, %v747
          %818 = vst.msk [vmem:[#allocation2 + $0xd8] sm:$0xff] %vm790, %v749
          %819 = vst.msk [vmem:[#allocation2 + $0xe0] sm:$0xff] %vm790, %v751
          %820 = vst.msk [vmem:[#allocation2 + $0xe8] sm:$0xff] %vm790, %v753
          %821 = vst.msk [vmem:[#allocation2 + $0xf0] sm:$0xff] %vm790, %v755
          %822 = vst.msk [vmem:[#allocation2 + $0xf8] sm:$0xff] %vm790, %v757
          %v823 = vmul.f32 %v212, 1.8666667
          %v824 = vmul.f32 %v213, 1.8666667
          %v825 = vmul.f32 %v214, 1.8666667
          %v826 = vmul.f32 %v215, 1.8666667
          %v827 = vmul.f32 %v216, 1.8666667
          %v828 = vmul.f32 %v217, 1.8666667
          %v829 = vmul.f32 %v218, 1.8666667
          %v830 = vmul.f32 %v219, 1.8666667
          %v831 = vmul.f32 %v220, 1.8666667
          %v832 = vmul.f32 %v221, 1.8666667
          %v833 = vmul.f32 %v222, 1.8666667
          %v834 = vmul.f32 %v223, 1.8666667
          %v835 = vmul.f32 %v224, 1.8666667
          %v836 = vmul.f32 %v225, 1.8666667
          %v837 = vmul.f32 %v226, 1.8666667
          %v838 = vmul.f32 %v227, 1.8666667
          %v839 = vmul.f32 %v228, 1.8666667
          %v840 = vmul.f32 %v229, 1.8666667
          %v841 = vmul.f32 %v230, 1.8666667
          %v842 = vmul.f32 %v231, 1.8666667
          %v843 = vmul.f32 %v232, 1.8666667
          %v844 = vmul.f32 %v233, 1.8666667
          %v845 = vmul.f32 %v234, 1.8666667
          %v846 = vmul.f32 %v235, 1.8666667
          %v847 = vmul.f32 %v236, 1.8666667
          %v848 = vmul.f32 %v237, 1.8666667
          %v849 = vmul.f32 %v238, 1.8666667
          %v850 = vmul.f32 %v239, 1.8666667
          %v851 = vmul.f32 %v240, 1.8666667
          %v852 = vmul.f32 %v241, 1.8666667
          %v853 = vmul.f32 %v242, 1.8666667
          %v854 = vmul.f32 %v243, 1.8666667
          %v855 = vadd.f32 %v823, 0.0
          %v856 = vadd.f32 %v824, 0.0
          %v857 = vadd.f32 %v825, 0.0
          %v858 = vadd.f32 %v826, 0.0
          %v859 = vadd.f32 %v827, 0.0
          %v860 = vadd.f32 %v828, 0.0
          %v861 = vadd.f32 %v829, 0.0
          %v862 = vadd.f32 %v830, 0.0
          %v863 = vadd.f32 %v831, 0.0
          %v864 = vadd.f32 %v832, 0.0
          %v865 = vadd.f32 %v833, 0.0
          %v866 = vadd.f32 %v834, 0.0
          %v867 = vadd.f32 %v835, 0.0
          %v868 = vadd.f32 %v836, 0.0
          %v869 = vadd.f32 %v837, 0.0
          %v870 = vadd.f32 %v838, 0.0
          %v871 = vadd.f32 %v839, 0.0
          %v872 = vadd.f32 %v840, 0.0
          %v873 = vadd.f32 %v841, 0.0
          %v874 = vadd.f32 %v842, 0.0
          %v875 = vadd.f32 %v843, 0.0
          %v876 = vadd.f32 %v844, 0.0
          %v877 = vadd.f32 %v845, 0.0
          %v878 = vadd.f32 %v846, 0.0
          %v879 = vadd.f32 %v847, 0.0
          %v880 = vadd.f32 %v848, 0.0
          %v881 = vadd.f32 %v849, 0.0
          %v882 = vadd.f32 %v850, 0.0
          %v883 = vadd.f32 %v851, 0.0
          %v884 = vadd.f32 %v852, 0.0
          %v885 = vadd.f32 %v853, 0.0
          %v886 = vadd.f32 %v854, 0.0
          %v887 = vmul.f32 %v855, %v630
          %v888 = vmul.f32 %v856, %v631
          %v889 = vmul.f32 %v857, %v632
          %v890 = vmul.f32 %v858, %v633
          %v891 = vmul.f32 %v859, %v634
          %v892 = vmul.f32 %v860, %v635
          %v893 = vmul.f32 %v861, %v636
          %v894 = vmul.f32 %v862, %v637
          %v895 = vmul.f32 %v863, %v638
          %v896 = vmul.f32 %v864, %v639
          %v897 = vmul.f32 %v865, %v640
          %v898 = vmul.f32 %v866, %v641
          %v899 = vmul.f32 %v867, %v642
          %v900 = vmul.f32 %v868, %v643
          %v901 = vmul.f32 %v869, %v644
          %v902 = vmul.f32 %v870, %v645
          %v903 = vmul.f32 %v871, %v646
          %v904 = vmul.f32 %v872, %v647
          %v905 = vmul.f32 %v873, %v648
          %v906 = vmul.f32 %v874, %v649
          %v907 = vmul.f32 %v875, %v650
          %v908 = vmul.f32 %v876, %v651
          %v909 = vmul.f32 %v877, %v652
          %v910 = vmul.f32 %v878, %v653
          %v911 = vmul.f32 %v879, %v654
          %v912 = vmul.f32 %v880, %v655
          %v913 = vmul.f32 %v881, %v656
          %v914 = vmul.f32 %v882, %v657
          %v915 = vmul.f32 %v883, %v658
          %v916 = vmul.f32 %v884, %v659
          %v917 = vmul.f32 %v885, %v660
          %v918 = vmul.f32 %v886, %v661
          %v919 = vmul.f32 %v341, -0.8
          %v920 = vmul.f32 %v342, -0.8
          %v921 = vmul.f32 %v343, -0.8
          %v922 = vmul.f32 %v344, -0.8
          %v923 = vmul.f32 %v345, -0.8
          %v924 = vmul.f32 %v346, -0.8
          %v925 = vmul.f32 %v347, -0.8
          %v926 = vmul.f32 %v348, -0.8
          %v927 = vmul.f32 %v349, -0.8
          %v928 = vmul.f32 %v350, -0.8
          %v929 = vmul.f32 %v351, -0.8
          %v930 = vmul.f32 %v352, -0.8
          %v931 = vmul.f32 %v353, -0.8
          %v932 = vmul.f32 %v354, -0.8
          %v933 = vmul.f32 %v355, -0.8
          %v934 = vmul.f32 %v356, -0.8
          %v935 = vmul.f32 %v357, -0.8
          %v936 = vmul.f32 %v358, -0.8
          %v937 = vmul.f32 %v359, -0.8
          %v938 = vmul.f32 %v360, -0.8
          %v939 = vmul.f32 %v361, -0.8
          %v940 = vmul.f32 %v362, -0.8
          %v941 = vmul.f32 %v363, -0.8
          %v942 = vmul.f32 %v364, -0.8
          %v943 = vmul.f32 %v365, -0.8
          %v944 = vmul.f32 %v366, -0.8
          %v945 = vmul.f32 %v367, -0.8
          %v946 = vmul.f32 %v368, -0.8
          %v947 = vmul.f32 %v369, -0.8
          %v948 = vmul.f32 %v370, -0.8
          %v949 = vmul.f32 %v371, -0.8
          %v950 = vmul.f32 %v372, -0.8
          %v951 = vadd.f32 %v887, %v919
          %v952 = vadd.f32 %v888, %v920
          %v953 = vadd.f32 %v889, %v921
          %v954 = vadd.f32 %v890, %v922
          %v955 = vadd.f32 %v891, %v923
          %v956 = vadd.f32 %v892, %v924
          %v957 = vadd.f32 %v893, %v925
          %v958 = vadd.f32 %v894, %v926
          %v959 = vadd.f32 %v895, %v927
          %v960 = vadd.f32 %v896, %v928
          %v961 = vadd.f32 %v897, %v929
          %v962 = vadd.f32 %v898, %v930
          %v963 = vadd.f32 %v899, %v931
          %v964 = vadd.f32 %v900, %v932
          %v965 = vadd.f32 %v901, %v933
          %v966 = vadd.f32 %v902, %v934
          %v967 = vadd.f32 %v903, %v935
          %v968 = vadd.f32 %v904, %v936
          %v969 = vadd.f32 %v905, %v937
          %v970 = vadd.f32 %v906, %v938
          %v971 = vadd.f32 %v907, %v939
          %v972 = vadd.f32 %v908, %v940
          %v973 = vadd.f32 %v909, %v941
          %v974 = vadd.f32 %v910, %v942
          %v975 = vadd.f32 %v911, %v943
          %v976 = vadd.f32 %v912, %v944
          %v977 = vadd.f32 %v913, %v945
          %v978 = vadd.f32 %v914, %v946
          %v979 = vadd.f32 %v915, %v947
          %v980 = vadd.f32 %v916, %v948
          %v981 = vadd.f32 %v917, %v949
          %v982 = vadd.f32 %v918, %v950
          %1015 = vrot.lane.b32.xlu0 %v951, 12
          %v1016 = vpop.permute.xlu0 %1015
          %1017 = vrot.lane.b32.xlu0 %v952, 12
          %v1018 = vpop.permute.xlu0 %1017
          %1019 = vrot.lane.b32.xlu0 %v953, 12
          %v1020 = vpop.permute.xlu0 %1019
          %1021 = vrot.lane.b32.xlu0 %v954, 12
          %v1022 = vpop.permute.xlu0 %1021
          %1023 = vrot.lane.b32.xlu0 %v955, 12
          %v1024 = vpop.permute.xlu0 %1023
          %1025 = vrot.lane.b32.xlu0 %v956, 12
          %v1026 = vpop.permute.xlu0 %1025
          %1027 = vrot.lane.b32.xlu0 %v957, 12
          %v1028 = vpop.permute.xlu0 %1027
          %1029 = vrot.lane.b32.xlu0 %v958, 12
          %v1030 = vpop.permute.xlu0 %1029
          %1031 = vrot.lane.b32.xlu0 %v959, 12
          %v1032 = vpop.permute.xlu0 %1031
          %1033 = vrot.lane.b32.xlu0 %v960, 12
          %v1034 = vpop.permute.xlu0 %1033
          %1035 = vrot.lane.b32.xlu0 %v961, 12
          %v1036 = vpop.permute.xlu0 %1035
          %1037 = vrot.lane.b32.xlu0 %v962, 12
          %v1038 = vpop.permute.xlu0 %1037
          %1039 = vrot.lane.b32.xlu0 %v963, 12
          %v1040 = vpop.permute.xlu0 %1039
          %1041 = vrot.lane.b32.xlu0 %v964, 12
          %v1042 = vpop.permute.xlu0 %1041
          %1043 = vrot.lane.b32.xlu0 %v965, 12
          %v1044 = vpop.permute.xlu0 %1043
          %1045 = vrot.lane.b32.xlu0 %v966, 12
          %v1046 = vpop.permute.xlu0 %1045
          %1047 = vrot.lane.b32.xlu0 %v967, 12
          %v1048 = vpop.permute.xlu0 %1047
          %1049 = vrot.lane.b32.xlu0 %v968, 12
          %v1050 = vpop.permute.xlu0 %1049
          %1051 = vrot.lane.b32.xlu0 %v969, 12
          %v1052 = vpop.permute.xlu0 %1051
          %1053 = vrot.lane.b32.xlu0 %v970, 12
          %v1054 = vpop.permute.xlu0 %1053
          %1055 = vrot.lane.b32.xlu0 %v971, 12
          %v1056 = vpop.permute.xlu0 %1055
          %1057 = vrot.lane.b32.xlu0 %v972, 12
          %v1058 = vpop.permute.xlu0 %1057
          %1059 = vrot.lane.b32.xlu0 %v973, 12
          %v1060 = vpop.permute.xlu0 %1059
          %1061 = vrot.lane.b32.xlu0 %v974, 12
          %v1062 = vpop.permute.xlu0 %1061
          %1063 = vrot.lane.b32.xlu0 %v975, 12
          %v1064 = vpop.permute.xlu0 %1063
          %1065 = vrot.lane.b32.xlu0 %v976, 12
          %v1066 = vpop.permute.xlu0 %1065
          %1067 = vrot.lane.b32.xlu0 %v977, 12
          %v1068 = vpop.permute.xlu0 %1067
          %1069 = vrot.lane.b32.xlu0 %v978, 12
          %v1070 = vpop.permute.xlu0 %1069
          %1071 = vrot.lane.b32.xlu0 %v979, 12
          %v1072 = vpop.permute.xlu0 %1071
          %1073 = vrot.lane.b32.xlu0 %v980, 12
          %v1074 = vpop.permute.xlu0 %1073
          %1075 = vrot.lane.b32.xlu0 %v981, 12
          %v1076 = vpop.permute.xlu0 %1075
          %1077 = vrot.lane.b32.xlu0 %v982, 12
          %v1078 = vpop.permute.xlu0 %1077
          %vm1111 = vcmask 130144
          %1112 = vst.msk [vmem:[#allocation2] sm:$0xff] %vm1111, %v1016
          %1113 = vst.msk [vmem:[#allocation2 + $0x8] sm:$0xff] %vm1111, %v1018
          %1114 = vst.msk [vmem:[#allocation2 + $0x10] sm:$0xff] %vm1111, %v1020
          %1115 = vst.msk [vmem:[#allocation2 + $0x18] sm:$0xff] %vm1111, %v1022
          %1116 = vst.msk [vmem:[#allocation2 + $0x20] sm:$0xff] %vm1111, %v1024
          %1117 = vst.msk [vmem:[#allocation2 + $0x28] sm:$0xff] %vm1111, %v1026
          %1118 = vst.msk [vmem:[#allocation2 + $0x30] sm:$0xff] %vm1111, %v1028
          %1119 = vst.msk [vmem:[#allocation2 + $0x38] sm:$0xff] %vm1111, %v1030
          %1120 = vst.msk [vmem:[#allocation2 + $0x40] sm:$0xff] %vm1111, %v1032
          %1121 = vst.msk [vmem:[#allocation2 + $0x48] sm:$0xff] %vm1111, %v1034
          %1122 = vst.msk [vmem:[#allocation2 + $0x50] sm:$0xff] %vm1111, %v1036
          %1123 = vst.msk [vmem:[#allocation2 + $0x58] sm:$0xff] %vm1111, %v1038
          %1124 = vst.msk [vmem:[#allocation2 + $0x60] sm:$0xff] %vm1111, %v1040
          %1125 = vst.msk [vmem:[#allocation2 + $0x68] sm:$0xff] %vm1111, %v1042
          %1126 = vst.msk [vmem:[#allocation2 + $0x70] sm:$0xff] %vm1111, %v1044
          %1127 = vst.msk [vmem:[#allocation2 + $0x78] sm:$0xff] %vm1111, %v1046
          %1128 = vst.msk [vmem:[#allocation2 + $0x80] sm:$0xff] %vm1111, %v1048
          %1129 = vst.msk [vmem:[#allocation2 + $0x88] sm:$0xff] %vm1111, %v1050
          %1130 = vst.msk [vmem:[#allocation2 + $0x90] sm:$0xff] %vm1111, %v1052
          %1131 = vst.msk [vmem:[#allocation2 + $0x98] sm:$0xff] %vm1111, %v1054
          %1132 = vst.msk [vmem:[#allocation2 + $0xa0] sm:$0xff] %vm1111, %v1056
          %1133 = vst.msk [vmem:[#allocation2 + $0xa8] sm:$0xff] %vm1111, %v1058
          %1134 = vst.msk [vmem:[#allocation2 + $0xb0] sm:$0xff] %vm1111, %v1060
          %1135 = vst.msk [vmem:[#allocation2 + $0xb8] sm:$0xff] %vm1111, %v1062
          %1136 = vst.msk [vmem:[#allocation2 + $0xc0] sm:$0xff] %vm1111, %v1064
          %1137 = vst.msk [vmem:[#allocation2 + $0xc8] sm:$0xff] %vm1111, %v1066
          %1138 = vst.msk [vmem:[#allocation2 + $0xd0] sm:$0xff] %vm1111, %v1068
          %1139 = vst.msk [vmem:[#allocation2 + $0xd8] sm:$0xff] %vm1111, %v1070
          %1140 = vst.msk [vmem:[#allocation2 + $0xe0] sm:$0xff] %vm1111, %v1072
          %1141 = vst.msk [vmem:[#allocation2 + $0xe8] sm:$0xff] %vm1111, %v1074
          %1142 = vst.msk [vmem:[#allocation2 + $0xf0] sm:$0xff] %vm1111, %v1076
          %1143 = vst.msk [vmem:[#allocation2 + $0xf8] sm:$0xff] %vm1111, %v1078
        $region32: #{tpu_custom_call.1} parent=27 // pred_fallthru
          _
        %v1144 = vld [vmem:[#allocation2] sm:$0xff]
        %v1145 = vld [vmem:[#allocation2 + $0x8] sm:$0xff]
        %v1146 = vld [vmem:[#allocation2 + $0x10] sm:$0xff]
        %v1147 = vld [vmem:[#allocation2 + $0x18] sm:$0xff]
        %v1148 = vld [vmem:[#allocation2 + $0x20] sm:$0xff]
        %v1149 = vld [vmem:[#allocation2 + $0x28] sm:$0xff]
        %v1150 = vld [vmem:[#allocation2 + $0x30] sm:$0xff]
        %v1151 = vld [vmem:[#allocation2 + $0x38] sm:$0xff]
        %v1152 = vld [vmem:[#allocation2 + $0x40] sm:$0xff]
        %v1153 = vld [vmem:[#allocation2 + $0x48] sm:$0xff]
        %v1154 = vld [vmem:[#allocation2 + $0x50] sm:$0xff]
        %v1155 = vld [vmem:[#allocation2 + $0x58] sm:$0xff]
        %v1156 = vld [vmem:[#allocation2 + $0x60] sm:$0xff]
        %v1157 = vld [vmem:[#allocation2 + $0x68] sm:$0xff]
        %v1158 = vld [vmem:[#allocation2 + $0x70] sm:$0xff]
        %v1159 = vld [vmem:[#allocation2 + $0x78] sm:$0xff]
        %v1160 = vld [vmem:[#allocation2 + $0x80] sm:$0xff]
        %v1161 = vld [vmem:[#allocation2 + $0x88] sm:$0xff]
        %v1162 = vld [vmem:[#allocation2 + $0x90] sm:$0xff]
        %v1163 = vld [vmem:[#allocation2 + $0x98] sm:$0xff]
        %v1164 = vld [vmem:[#allocation2 + $0xa0] sm:$0xff]
        %v1165 = vld [vmem:[#allocation2 + $0xa8] sm:$0xff]
        %v1166 = vld [vmem:[#allocation2 + $0xb0] sm:$0xff]
        %v1167 = vld [vmem:[#allocation2 + $0xb8] sm:$0xff]
        %v1168 = vld [vmem:[#allocation2 + $0xc0] sm:$0xff]
        %v1169 = vld [vmem:[#allocation2 + $0xc8] sm:$0xff]
        %v1170 = vld [vmem:[#allocation2 + $0xd0] sm:$0xff]
        %v1171 = vld [vmem:[#allocation2 + $0xd8] sm:$0xff]
        %v1172 = vld [vmem:[#allocation2 + $0xe0] sm:$0xff]
        %v1173 = vld [vmem:[#allocation2 + $0xe8] sm:$0xff]
        %v1174 = vld [vmem:[#allocation2 + $0xf0] sm:$0xff]
        %v1175 = vld [vmem:[#allocation2 + $0xf8] sm:$0xff]
        %v1176 = vld [vmem:[%s174] sm:$0xff]
        %v1177 = vld [vmem:[%s174 + $0x8] sm:$0xff]
        %vm1178 = vcmask 130048
        %v1180 = vsel %vm1178, %v1144, 0
        %v1183 = vsel %vm1178, %v1145, 0
        %v1186 = vsel %vm1178, %v1146, 0
        %v1189 = vsel %vm1178, %v1147, 0
        %v1192 = vsel %vm1178, %v1148, 0
        %v1195 = vsel %vm1178, %v1149, 0
        %v1198 = vsel %vm1178, %v1150, 0
        %v1201 = vsel %vm1178, %v1151, 0
        %v1204 = vsel %vm1178, %v1152, 0
        %v1207 = vsel %vm1178, %v1153, 0
        %v1210 = vsel %vm1178, %v1154, 0
        %v1213 = vsel %vm1178, %v1155, 0
        %v1216 = vsel %vm1178, %v1156, 0
        %v1219 = vsel %vm1178, %v1157, 0
        %v1222 = vsel %vm1178, %v1158, 0
        %v1225 = vsel %vm1178, %v1159, 0
        %v1228 = vsel %vm1178, %v1160, 0
        %v1231 = vsel %vm1178, %v1161, 0
        %v1234 = vsel %vm1178, %v1162, 0
        %v1237 = vsel %vm1178, %v1163, 0
        %v1240 = vsel %vm1178, %v1164, 0
        %v1243 = vsel %vm1178, %v1165, 0
        %v1246 = vsel %vm1178, %v1166, 0
        %v1249 = vsel %vm1178, %v1167, 0
        %v1252 = vsel %vm1178, %v1168, 0
        %v1255 = vsel %vm1178, %v1169, 0
        %v1258 = vsel %vm1178, %v1170, 0
        %v1261 = vsel %vm1178, %v1171, 0
        %v1264 = vsel %vm1178, %v1172, 0
        %v1267 = vsel %vm1178, %v1173, 0
        %v1270 = vsel %vm1178, %v1174, 0
        %v1273 = vsel %vm1178, %v1175, 0
        %1275 = vmatprep.subr.mxu0 0.0
        %1276 = vmatpush1.msra.mxu0 %v1176
        %1277 = vmatprep.subr.mxu0 0.0
        %1278 = vmatpush1.msra.mxu0 %v1177
        %1279 = vmatprep.subr.mxu0 0.0
        %1280 = vmatpush1.msra.mxu0 0.0
        %1281 = vmatprep.subr.mxu0 0.0
        %1282 = vmatpush1.msra.mxu0 0.0
        %1283 = vmatprep.subr.mxu0 0.0
        %1284 = vmatpush1.msra.mxu0 0.0
        %1285 = vmatprep.subr.mxu0 0.0
        %1286 = vmatpush1.msra.mxu0 0.0
        %1287 = vmatprep.subr.mxu0 0.0
        %1288 = vmatpush1.msra.mxu0 0.0
        %1289 = vmatprep.subr.mxu0 0.0
        %1290 = vmatpush1.msra.mxu0 0.0
        %1291 = vmatprep.subr.mxu0 0.0
        %1292 = vmatpush1.msra.mxu0 0.0
        %1293 = vmatprep.subr.mxu0 0.0
        %1294 = vmatpush1.msra.mxu0 0.0
        %1295 = vmatprep.subr.mxu0 0.0
        %1296 = vmatpush1.msra.mxu0 0.0
        %1297 = vmatprep.subr.mxu0 0.0
        %1298 = vmatpush1.msra.mxu0 0.0
        %1299 = vmatprep.subr.mxu0 0.0
        %1300 = vmatpush1.msra.mxu0 0.0
        %1301 = vmatprep.subr.mxu0 0.0
        %1302 = vmatpush1.msra.mxu0 0.0
        %1303 = vmatprep.subr.mxu0 0.0
        %1304 = vmatpush1.msra.mxu0 0.0
        %1305 = vmatprep.subr.mxu0 0.0
        %1306 = vmatpush1.msra.mxu0 0.0
        %1307 = vmatprep.subr.mxu0 0.0
        %1308 = vmatpush1.msra.mxu0 0.0
        %1309 = vmatprep.subr.mxu0 0.0
        %1310 = vmatpush1.msra.mxu0 0.0
        %1311 = vmatprep.subr.mxu0 0.0
        %1312 = vmatpush1.msra.mxu0 0.0
        %1313 = vmatprep.subr.mxu0 0.0
        %1314 = vmatpush1.msra.mxu0 0.0
        %1315 = vmatprep.subr.mxu0 0.0
        %1316 = vmatpush1.msra.mxu0 0.0
        %1317 = vmatprep.subr.mxu0 0.0
        %1318 = vmatpush1.msra.mxu0 0.0
        %1319 = vmatprep.subr.mxu0 0.0
        %1320 = vmatpush1.msra.mxu0 0.0
        %1321 = vmatprep.subr.mxu0 0.0
        %1322 = vmatpush1.msra.mxu0 0.0
        %1323 = vmatprep.subr.mxu0 0.0
        %1324 = vmatpush1.msra.mxu0 0.0
        %1325 = vmatprep.subr.mxu0 0.0
        %1326 = vmatpush1.msra.mxu0 0.0
        %1327 = vmatprep.subr.mxu0 0.0
        %1328 = vmatpush1.msra.mxu0 0.0
        %1329 = vmatprep.subr.mxu0 0.0
        %1330 = vmatpush1.msra.mxu0 0.0
        %1331 = vmatprep.subr.mxu0 0.0
        %1332 = vmatpush1.msra.mxu0 0.0
        %1333 = vmatprep.subr.mxu0 0.0
        %1334 = vmatpush1.msra.mxu0 0.0
        %1335 = vmatprep.subr.mxu0 0.0
        %1336 = vmatpush1.msra.mxu0 0.0
        %1337 = vmatprep.subr.mxu0 0.0
        %1338 = vmatpush1.msra.mxu0 0.0
        %1339 = vmatprep.mubr.f32.mxu0 0.0
        %1340 = vmatmul.mubr.f32.gmra.mrb[0].mxu0 %v1180
        %v1341 = vpop.f32.mrb[0].mxu0
        %v1342 = vadd.f32 0.0, %v1341
        %v1343 = vpop.f32.mrb[0].mxu0
        %1344 = vmatprep.mubr.f32.mxu0 0.0
        %1345 = vmatmul.mubr.f32.gmra.mrb[0].mxu0 %v1183
        %v1346 = vpop.f32.mrb[0].mxu0
        %v1347 = vadd.f32 0.0, %v1346
        %v1348 = vpop.f32.mrb[0].mxu0
        %1349 = vmatprep.mubr.f32.mxu0 0.0
        %1350 = vmatmul.mubr.f32.gmra.mrb[0].mxu0 %v1186
        %v1351 = vpop.f32.mrb[0].mxu0
        %v1352 = vadd.f32 0.0, %v1351
        %v1353 = vpop.f32.mrb[0].mxu0
        %1354 = vmatprep.mubr.f32.mxu0 0.0
        %1355 = vmatmul.mubr.f32.gmra.mrb[0].mxu0 %v1189
        %v1356 = vpop.f32.mrb[0].mxu0
        %v1357 = vadd.f32 0.0, %v1356
        %v1358 = vpop.f32.mrb[0].mxu0
        %1359 = vmatprep.mubr.f32.mxu0 0.0
        %1360 = vmatmul.mubr.f32.gmra.mrb[0].mxu0 %v1192
        %v1361 = vpop.f32.mrb[0].mxu0
        %v1362 = vadd.f32 0.0, %v1361
        %v1363 = vpop.f32.mrb[0].mxu0
        %1364 = vmatprep.mubr.f32.mxu0 0.0
        %1365 = vmatmul.mubr.f32.gmra.mrb[0].mxu0 %v1195
        %v1366 = vpop.f32.mrb[0].mxu0
        %v1367 = vadd.f32 0.0, %v1366
        %v1368 = vpop.f32.mrb[0].mxu0
        %1369 = vmatprep.mubr.f32.mxu0 0.0
        %1370 = vmatmul.mubr.f32.gmra.mrb[0].mxu0 %v1198
        %v1371 = vpop.f32.mrb[0].mxu0
        %v1372 = vadd.f32 0.0, %v1371
        %v1373 = vpop.f32.mrb[0].mxu0
        %1374 = vmatprep.mubr.f32.mxu0 0.0
        %1375 = vmatmul.mubr.f32.gmra.mrb[0].mxu0 %v1201
        %v1376 = vpop.f32.mrb[0].mxu0
        %v1377 = vadd.f32 0.0, %v1376
        %v1378 = vpop.f32.mrb[0].mxu0
        %1379 = vmatprep.mubr.f32.mxu0 0.0
        %1380 = vmatmul.mubr.f32.gmra.mrb[0].mxu0 %v1204
        %v1381 = vpop.f32.mrb[0].mxu0
        %v1382 = vadd.f32 0.0, %v1381
        %v1383 = vpop.f32.mrb[0].mxu0
        %1384 = vmatprep.mubr.f32.mxu0 0.0
        %1385 = vmatmul.mubr.f32.gmra.mrb[0].mxu0 %v1207
        %v1386 = vpop.f32.mrb[0].mxu0
        %v1387 = vadd.f32 0.0, %v1386
        %v1388 = vpop.f32.mrb[0].mxu0
        %1389 = vmatprep.mubr.f32.mxu0 0.0
        %1390 = vmatmul.mubr.f32.gmra.mrb[0].mxu0 %v1210
        %v1391 = vpop.f32.mrb[0].mxu0
        %v1392 = vadd.f32 0.0, %v1391
        %v1393 = vpop.f32.mrb[0].mxu0
        %1394 = vmatprep.mubr.f32.mxu0 0.0
        %1395 = vmatmul.mubr.f32.gmra.mrb[0].mxu0 %v1213
        %v1396 = vpop.f32.mrb[0].mxu0
        %v1397 = vadd.f32 0.0, %v1396
        %v1398 = vpop.f32.mrb[0].mxu0
        %1399 = vmatprep.mubr.f32.mxu0 0.0
        %1400 = vmatmul.mubr.f32.gmra.mrb[0].mxu0 %v1216
        %v1401 = vpop.f32.mrb[0].mxu0
        %v1402 = vadd.f32 0.0, %v1401
        %v1403 = vpop.f32.mrb[0].mxu0
        %1404 = vmatprep.mubr.f32.mxu0 0.0
        %1405 = vmatmul.mubr.f32.gmra.mrb[0].mxu0 %v1219
        %v1406 = vpop.f32.mrb[0].mxu0
        %v1407 = vadd.f32 0.0, %v1406
        %v1408 = vpop.f32.mrb[0].mxu0
        %1409 = vmatprep.mubr.f32.mxu0 0.0
        %1410 = vmatmul.mubr.f32.gmra.mrb[0].mxu0 %v1222
        %v1411 = vpop.f32.mrb[0].mxu0
        %v1412 = vadd.f32 0.0, %v1411
        %v1413 = vpop.f32.mrb[0].mxu0
        %1414 = vmatprep.mubr.f32.mxu0 0.0
        %1415 = vmatmul.mubr.f32.gmra.mrb[0].mxu0 %v1225
        %v1416 = vpop.f32.mrb[0].mxu0
        %v1417 = vadd.f32 0.0, %v1416
        %v1418 = vpop.f32.mrb[0].mxu0
        %1419 = vmatprep.mubr.f32.mxu0 0.0
        %1420 = vmatmul.mubr.f32.gmra.mrb[0].mxu0 %v1228
        %v1421 = vpop.f32.mrb[0].mxu0
        %v1422 = vadd.f32 0.0, %v1421
        %v1423 = vpop.f32.mrb[0].mxu0
        %1424 = vmatprep.mubr.f32.mxu0 0.0
        %1425 = vmatmul.mubr.f32.gmra.mrb[0].mxu0 %v1231
        %v1426 = vpop.f32.mrb[0].mxu0
        %v1427 = vadd.f32 0.0, %v1426
        %v1428 = vpop.f32.mrb[0].mxu0
        %1429 = vmatprep.mubr.f32.mxu0 0.0
        %1430 = vmatmul.mubr.f32.gmra.mrb[0].mxu0 %v1234
        %v1431 = vpop.f32.mrb[0].mxu0
        %v1432 = vadd.f32 0.0, %v1431
        %v1433 = vpop.f32.mrb[0].mxu0
        %1434 = vmatprep.mubr.f32.mxu0 0.0
        %1435 = vmatmul.mubr.f32.gmra.mrb[0].mxu0 %v1237
        %v1436 = vpop.f32.mrb[0].mxu0
        %v1437 = vadd.f32 0.0, %v1436
        %v1438 = vpop.f32.mrb[0].mxu0
        %1439 = vmatprep.mubr.f32.mxu0 0.0
        %1440 = vmatmul.mubr.f32.gmra.mrb[0].mxu0 %v1240
        %v1441 = vpop.f32.mrb[0].mxu0
        %v1442 = vadd.f32 0.0, %v1441
        %v1443 = vpop.f32.mrb[0].mxu0
        %1444 = vmatprep.mubr.f32.mxu0 0.0
        %1445 = vmatmul.mubr.f32.gmra.mrb[0].mxu0 %v1243
        %v1446 = vpop.f32.mrb[0].mxu0
        %v1447 = vadd.f32 0.0, %v1446
        %v1448 = vpop.f32.mrb[0].mxu0
        %1449 = vmatprep.mubr.f32.mxu0 0.0
        %1450 = vmatmul.mubr.f32.gmra.mrb[0].mxu0 %v1246
        %v1451 = vpop.f32.mrb[0].mxu0
        %v1452 = vadd.f32 0.0, %v1451
        %v1453 = vpop.f32.mrb[0].mxu0
        %1454 = vmatprep.mubr.f32.mxu0 0.0
        %1455 = vmatmul.mubr.f32.gmra.mrb[0].mxu0 %v1249
        %v1456 = vpop.f32.mrb[0].mxu0
        %v1457 = vadd.f32 0.0, %v1456
        %v1458 = vpop.f32.mrb[0].mxu0
        %1459 = vmatprep.mubr.f32.mxu0 0.0
        %1460 = vmatmul.mubr.f32.gmra.mrb[0].mxu0 %v1252
        %v1461 = vpop.f32.mrb[0].mxu0
        %v1462 = vadd.f32 0.0, %v1461
        %v1463 = vpop.f32.mrb[0].mxu0
        %1464 = vmatprep.mubr.f32.mxu0 0.0
        %1465 = vmatmul.mubr.f32.gmra.mrb[0].mxu0 %v1255
        %v1466 = vpop.f32.mrb[0].mxu0
        %v1467 = vadd.f32 0.0, %v1466
        %v1468 = vpop.f32.mrb[0].mxu0
        %1469 = vmatprep.mubr.f32.mxu0 0.0
        %1470 = vmatmul.mubr.f32.gmra.mrb[0].mxu0 %v1258
        %v1471 = vpop.f32.mrb[0].mxu0
        %v1472 = vadd.f32 0.0, %v1471
        %v1473 = vpop.f32.mrb[0].mxu0
        %1474 = vmatprep.mubr.f32.mxu0 0.0
        %1475 = vmatmul.mubr.f32.gmra.mrb[0].mxu0 %v1261
        %v1476 = vpop.f32.mrb[0].mxu0
        %v1477 = vadd.f32 0.0, %v1476
        %v1478 = vpop.f32.mrb[0].mxu0
        %1479 = vmatprep.mubr.f32.mxu0 0.0
        %1480 = vmatmul.mubr.f32.gmra.mrb[0].mxu0 %v1264
        %v1481 = vpop.f32.mrb[0].mxu0
        %v1482 = vadd.f32 0.0, %v1481
        %v1483 = vpop.f32.mrb[0].mxu0
        %1484 = vmatprep.mubr.f32.mxu0 0.0
        %1485 = vmatmul.mubr.f32.gmra.mrb[0].mxu0 %v1267
        %v1486 = vpop.f32.mrb[0].mxu0
        %v1487 = vadd.f32 0.0, %v1486
        %v1488 = vpop.f32.mrb[0].mxu0
        %1489 = vmatprep.mubr.f32.mxu0 0.0
        %1490 = vmatmul.mubr.f32.gmra.mrb[0].mxu0 %v1270
        %v1491 = vpop.f32.mrb[0].mxu0
        %v1492 = vadd.f32 0.0, %v1491
        %v1493 = vpop.f32.mrb[0].mxu0
        %1494 = vmatprep.mubr.f32.mxu0 0.0
        %1495 = vmatmul.mubr.f32.gmra.mrb[0].mxu0 %v1273
        %v1496 = vpop.f32.mrb[0].mxu0
        %v1497 = vadd.f32 0.0, %v1496
        %v1498 = vpop.f32.mrb[0].mxu0
        %1499 = vdwg.mxu0
        %1500 = vst [vmem:[%s164] sm:$0xff] %v1342
        %1501 = vst [vmem:[%s164 + $0x8] sm:$0xff] %v1347
        %1502 = vst [vmem:[%s164 + $0x10] sm:$0xff] %v1352
        %1503 = vst [vmem:[%s164 + $0x18] sm:$0xff] %v1357
        %1504 = vst [vmem:[%s164 + $0x20] sm:$0xff] %v1362
        %1505 = vst [vmem:[%s164 + $0x28] sm:$0xff] %v1367
        %1506 = vst [vmem:[%s164 + $0x30] sm:$0xff] %v1372
        %1507 = vst [vmem:[%s164 + $0x38] sm:$0xff] %v1377
        %1508 = vst [vmem:[%s164 + $0x40] sm:$0xff] %v1382
        %1509 = vst [vmem:[%s164 + $0x48] sm:$0xff] %v1387
        %1510 = vst [vmem:[%s164 + $0x50] sm:$0xff] %v1392
        %1511 = vst [vmem:[%s164 + $0x58] sm:$0xff] %v1397
        %1512 = vst [vmem:[%s164 + $0x60] sm:$0xff] %v1402
        %1513 = vst [vmem:[%s164 + $0x68] sm:$0xff] %v1407
        %1514 = vst [vmem:[%s164 + $0x70] sm:$0xff] %v1412
        %1515 = vst [vmem:[%s164 + $0x78] sm:$0xff] %v1417
        %1516 = vst [vmem:[%s164 + $0x80] sm:$0xff] %v1422
        %1517 = vst [vmem:[%s164 + $0x88] sm:$0xff] %v1427
        %1518 = vst [vmem:[%s164 + $0x90] sm:$0xff] %v1432
        %1519 = vst [vmem:[%s164 + $0x98] sm:$0xff] %v1437
        %1520 = vst [vmem:[%s164 + $0xa0] sm:$0xff] %v1442
        %1521 = vst [vmem:[%s164 + $0xa8] sm:$0xff] %v1447
        %1522 = vst [vmem:[%s164 + $0xb0] sm:$0xff] %v1452
        %1523 = vst [vmem:[%s164 + $0xb8] sm:$0xff] %v1457
        %1524 = vst [vmem:[%s164 + $0xc0] sm:$0xff] %v1462
        %1525 = vst [vmem:[%s164 + $0xc8] sm:$0xff] %v1467
        %1526 = vst [vmem:[%s164 + $0xd0] sm:$0xff] %v1472
        %1527 = vst [vmem:[%s164 + $0xd8] sm:$0xff] %v1477
        %1528 = vst [vmem:[%s164 + $0xe0] sm:$0xff] %v1482
        %1529 = vst [vmem:[%s164 + $0xe8] sm:$0xff] %v1487
        %1530 = vst [vmem:[%s164 + $0xf0] sm:$0xff] %v1492
        %1531 = vst [vmem:[%s164 + $0xf8] sm:$0xff] %v1497
        %s1532 = sand.u32 %s90, 1
        %s1533 = scalar_lea.sflag [#allocation4], %s1532
        %s1534 = sand.u32 %s90, 1
        %s1535 = smul.addr %s1534, 256
        %s1536 = scalar_lea.vmem [#allocation3], %s1535
        // Predicated region
        $region33: #{tpu_custom_call.1} parent=27 // pred_check
          %p1537 = pneg %p100
        $region34: #{tpu_custom_call.1} parent=27 // pred_check_branch
          %1539 = sbr.rel (%p1537) target = $region36
        $region35: #{tpu_custom_call.1} parent=27 // pred_region
          %s1540 = smul.u32 32, %s20
          %s1542 = ssub.s32 4096, 4096
          %1543 = vsyncadd %s1533, %s1542
          %s1544 = sadd.s32 %s21, %s1540
          %s1545 = smul.addr %s1544, 128
          %s1546 = scalar_lea.hbm %s2, %s1545
          %s1547 = sshll.u32 %s1536, 4
          %s1548 = int_to_ptr.vmem [resolvable:$true] %s1547
          %1553 = dma.vmem_to_hbm [thread:$0]  %s1548, 4096, %s1546, %s1533, 128, 128, 8
        $region36: #{tpu_custom_call.1} parent=27 // pred_fallthru
          _
      $region28: #{tpu_custom_call.1} parent=5 // pred_fallthru
        _
      %p1554 = scmp.le.s32.totalorder 2, %s11
      // Predicated region
      $region37: #{tpu_custom_call.1} parent=5 // pred_check
        %p1555 = pneg %p1554
      $region38: #{tpu_custom_call.1} parent=5 // pred_check_branch
        %1557 = sbr.rel (%p1555) target = $region40
      $region39: #{tpu_custom_call.1} parent=5 // pred_region
        %s1558 = ssub.s32 %s11, 2
        // Predicated region
        $region41: #{tpu_custom_call.1} parent=39 // pred_check
          %p1559 = pneg %p106
        $region42: #{tpu_custom_call.1} parent=39 // pred_check_branch
          %1561 = sbr.rel (%p1559) target = $region44
        $region43: #{tpu_custom_call.1} parent=39 // pred_region
          %s1562 = sand.u32 %s91, 1
          %s1563 = scalar_lea.sflag [#allocation4], %s1562
          %s1564 = sand.u32 %s91, 1
          %s1565 = smul.addr %s1564, 256
          %s1566 = scalar_lea.vmem [#allocation3], %s1565
          %1567 = dma.done %s1563, 4096
        $region44: #{tpu_custom_call.1} parent=39 // pred_fallthru
          _
      $region40: #{tpu_custom_call.1} parent=5 // pred_fallthru
        _
    $region6: #{tpu_custom_call.1} parent=1 // loop_footer
      %s15 = sadd.s32 1, %s11
    $region7: #{tpu_custom_call.1} parent=1 // loop_footer_branch
      %10 = sbr.rel target = $region3
    $region8: #{tpu_custom_call.1} parent=1 // loop_exit
      _
    %1568 = vsyncpa [#allocation4], 1
    %s1569 = scalar_lea.sflag [#allocation4], 1
    %1570 = vsyncpa %s1569, 1

</llo_original>
